<compile_context>
chip_gen: v7x
topology: tpu7x:2x2x1
jax: 0.10.0
libtpu: 0.0.40
codegen_flags: <defaults>
</compile_context>

<pallas_src>
import functools

import numpy as np
import jax
import jax.numpy as jnp
from jax.experimental import pallas as pl
from jax.experimental.pallas import tpu as pltpu


def _round_up(x, m):
    return (x + m - 1) // m * m


# ----------------------------------------------------------------------------
# Fused TCN-stack kernel: all TemporalBlocks for one batch tile.
# ----------------------------------------------------------------------------
def _tcn_stack_kernel(k, dilations, down_map, c_out_pad,
                      x_ref, w1_ref, b1_ref, w2_ref, b2_ref, wd_ref, bd_ref,
                      o_ref):
    bt, t, c = x_ref.shape
    L = len(dilations)

    # Time index, shared by every level's causal mask (hoisted: no per-iter
    # iota/broadcast re-materialization).
    t_idx = jax.lax.broadcasted_iota(jnp.int32, (bt, t, 1), 1)

    def causal_conv(h2d, w_taps_ref, lvl, b, dilation):
        # Conv1d(padding=(k-1)*dil) + Chomp1d == left-padded causal conv:
        #   y[t] = b + sum_j x[t - (k-1-j)*dil] @ w[j]
        # Per-tap K=c_pad matmuls; the time shift is applied to the f32 matmul
        # result with pltpu.roll (XLU) + zeroing the causal head (VPU), so no
        # padded scratch, no tap concat, no misaligned sublane loads.
        acc = jnp.dot(h2d, w_taps_ref[lvl * k + (k - 1)],
                      preferred_element_type=jnp.float32) + b
        for j in range(k - 1):
            shift = (k - 1 - j) * dilation              # static per level/tap
            z = jnp.dot(h2d, w_taps_ref[lvl * k + j],
                        preferred_element_type=jnp.float32)
            z = pltpu.roll(z.reshape(bt, t, c), shift, axis=1)
            z = jnp.where(t_idx >= shift, z, 0.0).reshape(bt * t, c)
            acc = acc + z
        return acc                                      # (bt*t, c) f32

    h = x_ref[...].reshape(bt * t, c)                   # bf16 (t % 8 == 0)
    for lvl in range(L):                                # static unrolled levels
        d = dilations[lvl]
        # conv1 -> chomp -> relu   (dropout == identity at inference)
        h1 = jnp.maximum(causal_conv(h, w1_ref, lvl, b1_ref[lvl], d), 0.0)
        # conv2 -> chomp -> relu
        h2 = jnp.maximum(
            causal_conv(h1.astype(jnp.bfloat16), w2_ref, lvl, b2_ref[lvl], d),
            0.0)
        # residual (1x1 downsample only where Cin != Cout)
        if down_map[lvl] is not None:
            di = down_map[lvl]
            res = (jnp.dot(h, wd_ref[di], preferred_element_type=jnp.float32)
                   + bd_ref[di])
        else:
            res = h.astype(jnp.float32)
        y = jnp.maximum(h2 + res, 0.0)                  # (bt*t, c) f32
        if lvl < L - 1:
            h = y.astype(jnp.bfloat16)                  # bf16 inter-level store
        else:
            # Final level: store the f32 accumulator directly (trimmed to the
            # lane-dense output channel pad) in the caller's dtype.
            o_ref[...] = y.reshape(bt, t, c)[:, :, :c_out_pad].astype(o_ref.dtype)


# ----------------------------------------------------------------------------
# TCNLayer forward (wrapper: pad/pack params, pick batch tile, one pallas_call).
# ----------------------------------------------------------------------------
def get_last_visit(out, mask):
    if mask is None:
        return out[:, -1, :]
    # NOTE: an all-zero mask row would give idx=-1; clamp to 0 (torch would err).
    idx = jnp.maximum(jnp.sum(mask.astype(jnp.int32), axis=1) - 1, 0)
    return out[jnp.arange(out.shape[0]), idx, :]


def tcn_layer_forward(x, blocks, kernel_size, mask=None):
    """Mirrors TCNLayer.forward.  x: (B, T, input_dim) -> (last_out, out).

    blocks: per-level tuples (w1 (k,cin,cout), b1 (cout,), w2 (k,cout,cout),
    b2 (cout,), wd (cin,cout)|None, bd (cout,)|None) of effective weights.
    """
    B, T, cin0 = x.shape
    k = kernel_size
    L = len(blocks)
    dilations = tuple(2 ** i for i in range(L))
    couts = [blk[0].shape[2] for blk in blocks]
    cout_last = couts[-1]

    # Lane-dense layout: channels padded to multiples of 128; time padded to a
    # multiple of 8 so (bt, t, c) <-> (bt*t, c) reshapes are layout no-ops and
    # sublane rolls are clean.  Output only carries round_up(cout_last, 128).
    c_pad = _round_up(max([cin0] + couts), 128)
    c_out_pad = _round_up(cout_last, 128)
    t_pad = _round_up(T, 8)

    def pad_to(a, shape):
        return jnp.pad(a, [(0, s - d) for d, s in zip(a.shape, shape)])

    w1s, b1s, w2s, b2s, wds, bds = [], [], [], [], [], []
    down_map = []
    for (w1, b1, w2, b2, wd, bd) in blocks:
        w1s.append(pad_to(w1, (k, c_pad, c_pad)))
        w2s.append(pad_to(w2, (k, c_pad, c_pad)))
        b1s.append(pad_to(b1.reshape(1, -1), (1, c_pad)))
        b2s.append(pad_to(b2.reshape(1, -1), (1, c_pad)))
        if wd is None:
            down_map.append(None)
        else:
            down_map.append(len(wds))
            wds.append(pad_to(wd, (c_pad, c_pad)))
            bds.append(pad_to(bd.reshape(1, -1), (1, c_pad)))
    if not wds:  # keep arg shapes static; the kernel never reads this dummy
        wds.append(jnp.zeros((c_pad, c_pad), jnp.float32))
        bds.append(jnp.zeros((1, c_pad), jnp.float32))
    nd = len(wds)

    w1_all = jnp.stack(w1s).reshape(L * k, c_pad, c_pad).astype(jnp.bfloat16)
    w2_all = jnp.stack(w2s).reshape(L * k, c_pad, c_pad).astype(jnp.bfloat16)
    b1_all = jnp.stack(b1s).astype(jnp.float32)          # (L, 1, Cp)
    b2_all = jnp.stack(b2s).astype(jnp.float32)          # (L, 1, Cp)
    wd_all = jnp.stack(wds).astype(jnp.bfloat16)         # (nd, Cp, Cp)
    bd_all = jnp.stack(bds).astype(jnp.float32)          # (nd, 1, Cp)

    out_dtype = x.dtype
    out_itemsize = jnp.dtype(out_dtype).itemsize

    # Physical VMEM (clamp the scoped limit to 75% of it — v7x only has 64 MiB).
    phys_vmem = 64 * 1024 * 1024
    try:
        phys_vmem = int(pltpu.get_tpu_info().vmem_capacity_bytes)
    except Exception:
        pass

    # Megacore: on v7x keep >= 2 grid steps so both TensorCores get work.
    try:
        kind = jax.devices()[0].device_kind.lower()
    except Exception:
        kind = ""
    num_tc = 2 if "v7" in kind else 1

    weight_bytes = 2 * ((w1_all.size + w2_all.size + wd_all.size) * 2
                        + (b1_all.size + b2_all.size + bd_all.size) * 4)

    def est_vmem(bt):
        rows = bt * t_pad
        return (2 * rows * c_pad * 2                 # input block, 2 buffers (bf16)
                + 2 * rows * c_out_pad * out_itemsize  # output block, 2 buffers
                + 5 * rows * c_pad * 4               # live f32/bf16 temporaries
                + weight_bytes)

    # Batch tile: target ~2048 matmul rows per grid step, shrink to fit VMEM.
    bt = max(1, min(B, 2048 // max(t_pad, 1)))
    if num_tc > 1 and B > 1:
        bt = min(bt, -(-B // num_tc))
    budget = int(0.35 * phys_vmem)
    while bt > 1 and est_vmem(bt) > budget:
        bt = max(1, bt // 2)

    # Pad B up to a multiple of bt (padded rows compute garbage, sliced away).
    b_pad = pl.cdiv(B, bt) * bt
    xp = pad_to(x, (b_pad, t_pad, c_pad)).astype(jnp.bfloat16)

    vmem_limit = int(min(max(32 * 1024 * 1024, 2 * est_vmem(bt)),
                         int(0.75 * phys_vmem)))

    kernel = functools.partial(_tcn_stack_kernel, k, dilations,
                               tuple(down_map), c_out_pad)

    out_pad = pl.pallas_call(
        kernel,
        out_shape=jax.ShapeDtypeStruct((b_pad, t_pad, c_out_pad), out_dtype),
        grid=(b_pad // bt,),
        in_specs=[
            pl.BlockSpec((bt, t_pad, c_pad), lambda b: (b, 0, 0)),
            pl.BlockSpec((L * k, c_pad, c_pad), lambda b: (0, 0, 0)),
            pl.BlockSpec((L, 1, c_pad), lambda b: (0, 0, 0)),
            pl.BlockSpec((L * k, c_pad, c_pad), lambda b: (0, 0, 0)),
            pl.BlockSpec((L, 1, c_pad), lambda b: (0, 0, 0)),
            pl.BlockSpec((nd, c_pad, c_pad), lambda b: (0, 0, 0)),
            pl.BlockSpec((nd, 1, c_pad), lambda b: (0, 0, 0)),
        ],
        out_specs=pl.BlockSpec((bt, t_pad, c_out_pad), lambda b: (b, 0, 0)),
        compiler_params=pltpu.CompilerParams(
            dimension_semantics=("parallel",),
            vmem_limit_bytes=vmem_limit),
    )(xp, w1_all, b1_all, w2_all, b2_all, wd_all, bd_all)

    out = out_pad[:B, :T, :cout_last]
    if out.dtype != x.dtype:
        out = out.astype(x.dtype)
    last_out = get_last_visit(out, mask)
    return last_out, out


# ----------------------------------------------------------------------------
# Pure-JAX reference (lax conv, f32) for correctness checking.
# ----------------------------------------------------------------------------
def _ref_causal_conv(x, w, b, dilation):
    k = w.shape[0]
    pad = (k - 1) * dilation
    y = jax.lax.conv_general_dilated(
        x, w, window_strides=(1,), padding=[(pad, 0)],
        rhs_dilation=(dilation,), dimension_numbers=('NWC', 'WIO', 'NWC'))
    return y + b


def _ref_temporal_block(x, params, dilation):
    w1, b1, w2, b2, wd, bd = params
    h1 = jax.nn.relu(_ref_causal_conv(x, w1, b1, dilation))
    h2 = jax.nn.relu(_ref_causal_conv(h1, w2, b2, dilation))
    res = x if wd is None else jnp.einsum('btc,cd->btd', x, wd) + bd
    return jax.nn.relu(h2 + res)


# ----------------------------------------------------------------------------
# Demo / self-test.
# ----------------------------------------------------------------------------
if __name__ == "__main__":
    B, T = 2, 16
    input_dim, hidden_dim, max_seq_length, kernel_size = 4, 8, 16, 2

    # Same depth rule as TCNLayer.__init__ for int hidden_dim.
    num_levels = int(np.ceil(np.log(max_seq_length / 2) / np.log(kernel_size)))
    channels = [hidden_dim] * num_levels

    keys = jax.random.split(jax.random.PRNGKey(0), 1 + 6 * num_levels)

    def bf16_round(a):  # make reference use the same bf16-representable values
        return a.astype(jnp.bfloat16).astype(jnp.float32)

    x = bf16_round(jax.random.normal(keys[0], (B, T, input_dim), dtype=jnp.float32))

    blocks = []
    ki = 1
    for i in range(num_levels):
        cin = input_dim if i == 0 else channels[i - 1]
        cout = channels[i]
        # Deterministic effective weights (weight_norm folds to these at
        # inference); torch layout (Cout, Cin, K) stored transposed as (K, Cin, Cout).
        w1 = bf16_round(0.01 * jax.random.normal(keys[ki], (kernel_size, cin, cout))); ki += 1
        b1 = bf16_round(0.10 * jax.random.normal(keys[ki], (cout,))); ki += 1
        w2 = bf16_round(0.01 * jax.random.normal(keys[ki], (kernel_size, cout, cout))); ki += 1
        b2 = bf16_round(0.10 * jax.random.normal(keys[ki], (cout,))); ki += 1
        if cin != cout:
            wd = bf16_round(0.01 * jax.random.normal(keys[ki], (cin, cout))); ki += 1
            bd = bf16_round(0.10 * jax.random.normal(keys[ki], (cout,))); ki += 1
        else:
            wd, bd = None, None
            ki += 2
        blocks.append((w1, b1, w2, b2, wd, bd))

    # Pallas forward (fused stack).
    last_out, out = tcn_layer_forward(x, blocks, kernel_size, mask=None)
    jax.block_until_ready((last_out, out))

    # Reference forward (f32).
    out_ref = x
    for i, params in enumerate(blocks):
        out_ref = _ref_temporal_block(out_ref, params, dilation=2 ** i)
    last_ref = out_ref[:, -1, :]

    assert out.shape == (B, T, hidden_dim)
    assert last_out.shape == (B, hidden_dim)
    # bf16 operands / bf16 inter-level activation storage -> relaxed tolerances.
    np.testing.assert_allclose(np.asarray(out), np.asarray(out_ref),
                               rtol=5e-2, atol=1e-2)
    np.testing.assert_allclose(np.asarray(last_out), np.asarray(last_ref),
                               rtol=5e-2, atol=1e-2)
    print("KERNEL_OK")
</pallas_src>

<mosaic_0001>
module attributes {stable_mosaic.version = 11 : i64} {
  func.func @_tcn_stack_kernel(%arg0: i32, %arg1: memref<2x16x128xbf16, #tpu.memory_space<vmem>>, %arg2: memref<6x128x128xbf16, #tpu.memory_space<vmem>>, %arg3: memref<3x1x128xf32, #tpu.memory_space<vmem>>, %arg4: memref<6x128x128xbf16, #tpu.memory_space<vmem>>, %arg5: memref<3x1x128xf32, #tpu.memory_space<vmem>>, %arg6: memref<1x128x128xbf16, #tpu.memory_space<vmem>>, %arg7: memref<1x1x128xf32, #tpu.memory_space<vmem>>, %arg8: memref<2x16x128xf32, #tpu.memory_space<vmem>>) attributes {dimension_semantics = [#tpu.dimension_semantics<parallel>], iteration_bounds = array<i64: 1>, scalar_prefetch = 0 : i64, scratch_operands = 0 : i64, tpu.core_type = #tpu.core_type<tc>, window_params = [{transform_indices = @transform_0, window_bounds = array<i64: 2, 16, 128>}, {pipeline_mode = #tpu.pipeline_mode<synchronous>, transform_indices = @transform_1, window_bounds = array<i64: 6, 128, 128>}, {pipeline_mode = #tpu.pipeline_mode<synchronous>, transform_indices = @transform_2, window_bounds = array<i64: 3, 1, 128>}, {pipeline_mode = #tpu.pipeline_mode<synchronous>, transform_indices = @transform_3, window_bounds = array<i64: 6, 128, 128>}, {pipeline_mode = #tpu.pipeline_mode<synchronous>, transform_indices = @transform_4, window_bounds = array<i64: 3, 1, 128>}, {pipeline_mode = #tpu.pipeline_mode<synchronous>, transform_indices = @transform_5, window_bounds = array<i64: 1, 128, 128>}, {pipeline_mode = #tpu.pipeline_mode<synchronous>, transform_indices = @transform_6, window_bounds = array<i64: 1, 1, 128>}, {transform_indices = @transform_7, window_bounds = array<i64: 2, 16, 128>}]} {
    %0 = tpu.iota {dimensions = array<i32: 1>} : vector<2x16x1xi32>
    %c0 = arith.constant 0 : index
    %c0_0 = arith.constant 0 : index
    %c0_1 = arith.constant 0 : index
    %1 = vector.load %arg1[%c0, %c0_0, %c0_1] : memref<2x16x128xbf16, #tpu.memory_space<vmem>>, vector<2x16x128xbf16>
    %2 = vector.shape_cast %1 : vector<2x16x128xbf16> to vector<32x128xbf16>
    %c0_2 = arith.constant 0 : index
    %c0_3 = arith.constant 0 : index
    %c0_4 = arith.constant 0 : index
    %3 = vector.load %arg3[%c0_2, %c0_3, %c0_4] : memref<3x1x128xf32, #tpu.memory_space<vmem>>, vector<1x1x128xf32>
    %4 = vector.shape_cast %3 : vector<1x1x128xf32> to vector<1x128xf32>
    %c1 = arith.constant 1 : index
    %c0_5 = arith.constant 0 : index
    %c0_6 = arith.constant 0 : index
    %5 = vector.load %arg2[%c1, %c0_5, %c0_6] : memref<6x128x128xbf16, #tpu.memory_space<vmem>>, vector<1x128x128xbf16>
    %6 = vector.shape_cast %5 : vector<1x128x128xbf16> to vector<128x128xbf16>
    %cst = arith.constant dense<0.000000e+00> : vector<32x128xf32>
    %7 = tpu.matmul %2, %6, %cst {dimension_numbers = #tpu.dot_dimension_numbers<[1], [0], [0], [1], [0, 0, 1, 1], [], []>} : vector<32x128xbf16>, vector<128x128xbf16>, vector<32x128xf32> -> vector<32x128xf32>
    %8 = vector.broadcast %4 : vector<1x128xf32> to vector<32x128xf32>
    %9 = arith.addf %7, %8 : vector<32x128xf32>
    %c0_7 = arith.constant 0 : index
    %c0_8 = arith.constant 0 : index
    %c0_9 = arith.constant 0 : index
    %10 = vector.load %arg2[%c0_7, %c0_8, %c0_9] : memref<6x128x128xbf16, #tpu.memory_space<vmem>>, vector<1x128x128xbf16>
    %11 = vector.shape_cast %10 : vector<1x128x128xbf16> to vector<128x128xbf16>
    %cst_10 = arith.constant dense<0.000000e+00> : vector<32x128xf32>
    %12 = tpu.matmul %2, %11, %cst_10 {dimension_numbers = #tpu.dot_dimension_numbers<[1], [0], [0], [1], [0, 0, 1, 1], [], []>} : vector<32x128xbf16>, vector<128x128xbf16>, vector<32x128xf32> -> vector<32x128xf32>
    %13 = vector.shape_cast %12 : vector<32x128xf32> to vector<2x16x128xf32>
    %c1_i32 = arith.constant 1 : i32
    %14 = tpu.dynamic_rotate %13 by %c1_i32 dim 1 : vector<2x16x128xf32>, i32 -> vector<2x16x128xf32>
    %c1_i32_11 = arith.constant 1 : i32
    %15 = vector.broadcast %c1_i32_11 : i32 to vector<2x16x1xi32>
    %16 = arith.cmpi sge, %0, %15 : vector<2x16x1xi32>
    %cst_12 = arith.constant 0.000000e+00 : f32
    %17 = vector.shape_cast %16 : vector<2x16x1xi1> to vector<2x16x1xi1>
    %18 = vector.broadcast %17 : vector<2x16x1xi1> to vector<2x16x128xi1>
    %19 = vector.broadcast %cst_12 : f32 to vector<2x16x128xf32>
    %20 = arith.select %18, %14, %19 : vector<2x16x128xi1>, vector<2x16x128xf32>
    %21 = vector.shape_cast %20 : vector<2x16x128xf32> to vector<32x128xf32>
    %22 = arith.addf %9, %21 : vector<32x128xf32>
    %cst_13 = arith.constant 0.000000e+00 : f32
    %23 = vector.broadcast %cst_13 : f32 to vector<32x128xf32>
    %24 = arith.maximumf %22, %23 : vector<32x128xf32>
    %25 = arith.truncf %24 : vector<32x128xf32> to vector<32x128xbf16>
    %c0_14 = arith.constant 0 : index
    %c0_15 = arith.constant 0 : index
    %c0_16 = arith.constant 0 : index
    %26 = vector.load %arg5[%c0_14, %c0_15, %c0_16] : memref<3x1x128xf32, #tpu.memory_space<vmem>>, vector<1x1x128xf32>
    %27 = vector.shape_cast %26 : vector<1x1x128xf32> to vector<1x128xf32>
    %c1_17 = arith.constant 1 : index
    %c0_18 = arith.constant 0 : index
    %c0_19 = arith.constant 0 : index
    %28 = vector.load %arg4[%c1_17, %c0_18, %c0_19] : memref<6x128x128xbf16, #tpu.memory_space<vmem>>, vector<1x128x128xbf16>
    %29 = vector.shape_cast %28 : vector<1x128x128xbf16> to vector<128x128xbf16>
    %cst_20 = arith.constant dense<0.000000e+00> : vector<32x128xf32>
    %30 = tpu.matmul %25, %29, %cst_20 {dimension_numbers = #tpu.dot_dimension_numbers<[1], [0], [0], [1], [0, 0, 1, 1], [], []>} : vector<32x128xbf16>, vector<128x128xbf16>, vector<32x128xf32> -> vector<32x128xf32>
    %31 = vector.broadcast %27 : vector<1x128xf32> to vector<32x128xf32>
    %32 = arith.addf %30, %31 : vector<32x128xf32>
    %c0_21 = arith.constant 0 : index
    %c0_22 = arith.constant 0 : index
    %c0_23 = arith.constant 0 : index
    %33 = vector.load %arg4[%c0_21, %c0_22, %c0_23] : memref<6x128x128xbf16, #tpu.memory_space<vmem>>, vector<1x128x128xbf16>
    %34 = vector.shape_cast %33 : vector<1x128x128xbf16> to vector<128x128xbf16>
    %cst_24 = arith.constant dense<0.000000e+00> : vector<32x128xf32>
    %35 = tpu.matmul %25, %34, %cst_24 {dimension_numbers = #tpu.dot_dimension_numbers<[1], [0], [0], [1], [0, 0, 1, 1], [], []>} : vector<32x128xbf16>, vector<128x128xbf16>, vector<32x128xf32> -> vector<32x128xf32>
    %36 = vector.shape_cast %35 : vector<32x128xf32> to vector<2x16x128xf32>
    %c1_i32_25 = arith.constant 1 : i32
    %37 = tpu.dynamic_rotate %36 by %c1_i32_25 dim 1 : vector<2x16x128xf32>, i32 -> vector<2x16x128xf32>
    %c1_i32_26 = arith.constant 1 : i32
    %38 = vector.broadcast %c1_i32_26 : i32 to vector<2x16x1xi32>
    %39 = arith.cmpi sge, %0, %38 : vector<2x16x1xi32>
    %cst_27 = arith.constant 0.000000e+00 : f32
    %40 = vector.shape_cast %39 : vector<2x16x1xi1> to vector<2x16x1xi1>
    %41 = vector.broadcast %40 : vector<2x16x1xi1> to vector<2x16x128xi1>
    %42 = vector.broadcast %cst_27 : f32 to vector<2x16x128xf32>
    %43 = arith.select %41, %37, %42 : vector<2x16x128xi1>, vector<2x16x128xf32>
    %44 = vector.shape_cast %43 : vector<2x16x128xf32> to vector<32x128xf32>
    %45 = arith.addf %32, %44 : vector<32x128xf32>
    %cst_28 = arith.constant 0.000000e+00 : f32
    %46 = vector.broadcast %cst_28 : f32 to vector<32x128xf32>
    %47 = arith.maximumf %45, %46 : vector<32x128xf32>
    %c0_29 = arith.constant 0 : index
    %c0_30 = arith.constant 0 : index
    %c0_31 = arith.constant 0 : index
    %48 = vector.load %arg6[%c0_29, %c0_30, %c0_31] : memref<1x128x128xbf16, #tpu.memory_space<vmem>>, vector<1x128x128xbf16>
    %49 = vector.shape_cast %48 : vector<1x128x128xbf16> to vector<128x128xbf16>
    %cst_32 = arith.constant dense<0.000000e+00> : vector<32x128xf32>
    %50 = tpu.matmul %2, %49, %cst_32 {dimension_numbers = #tpu.dot_dimension_numbers<[1], [0], [0], [1], [0, 0, 1, 1], [], []>} : vector<32x128xbf16>, vector<128x128xbf16>, vector<32x128xf32> -> vector<32x128xf32>
    %c0_33 = arith.constant 0 : index
    %c0_34 = arith.constant 0 : index
    %c0_35 = arith.constant 0 : index
    %51 = vector.load %arg7[%c0_33, %c0_34, %c0_35] : memref<1x1x128xf32, #tpu.memory_space<vmem>>, vector<1x1x128xf32>
    %52 = vector.shape_cast %51 : vector<1x1x128xf32> to vector<1x128xf32>
    %53 = vector.broadcast %52 : vector<1x128xf32> to vector<32x128xf32>
    %54 = arith.addf %50, %53 : vector<32x128xf32>
    %55 = arith.addf %47, %54 : vector<32x128xf32>
    %cst_36 = arith.constant 0.000000e+00 : f32
    %56 = vector.broadcast %cst_36 : f32 to vector<32x128xf32>
    %57 = arith.maximumf %55, %56 : vector<32x128xf32>
    %58 = arith.truncf %57 : vector<32x128xf32> to vector<32x128xbf16>
    %c1_37 = arith.constant 1 : index
    %c0_38 = arith.constant 0 : index
    %c0_39 = arith.constant 0 : index
    %59 = vector.load %arg3[%c1_37, %c0_38, %c0_39] : memref<3x1x128xf32, #tpu.memory_space<vmem>>, vector<1x1x128xf32>
    %60 = vector.shape_cast %59 : vector<1x1x128xf32> to vector<1x128xf32>
    %c3 = arith.constant 3 : index
    %c0_40 = arith.constant 0 : index
    %c0_41 = arith.constant 0 : index
    %61 = vector.load %arg2[%c3, %c0_40, %c0_41] : memref<6x128x128xbf16, #tpu.memory_space<vmem>>, vector<1x128x128xbf16>
    %62 = vector.shape_cast %61 : vector<1x128x128xbf16> to vector<128x128xbf16>
    %cst_42 = arith.constant dense<0.000000e+00> : vector<32x128xf32>
    %63 = tpu.matmul %58, %62, %cst_42 {dimension_numbers = #tpu.dot_dimension_numbers<[1], [0], [0], [1], [0, 0, 1, 1], [], []>} : vector<32x128xbf16>, vector<128x128xbf16>, vector<32x128xf32> -> vector<32x128xf32>
    %64 = vector.broadcast %60 : vector<1x128xf32> to vector<32x128xf32>
    %65 = arith.addf %63, %64 : vector<32x128xf32>
    %c2 = arith.constant 2 : index
    %c0_43 = arith.constant 0 : index
    %c0_44 = arith.constant 0 : index
    %66 = vector.load %arg2[%c2, %c0_43, %c0_44] : memref<6x128x128xbf16, #tpu.memory_space<vmem>>, vector<1x128x128xbf16>
    %67 = vector.shape_cast %66 : vector<1x128x128xbf16> to vector<128x128xbf16>
    %cst_45 = arith.constant dense<0.000000e+00> : vector<32x128xf32>
    %68 = tpu.matmul %58, %67, %cst_45 {dimension_numbers = #tpu.dot_dimension_numbers<[1], [0], [0], [1], [0, 0, 1, 1], [], []>} : vector<32x128xbf16>, vector<128x128xbf16>, vector<32x128xf32> -> vector<32x128xf32>
    %69 = vector.shape_cast %68 : vector<32x128xf32> to vector<2x16x128xf32>
    %c2_i32 = arith.constant 2 : i32
    %70 = tpu.dynamic_rotate %69 by %c2_i32 dim 1 : vector<2x16x128xf32>, i32 -> vector<2x16x128xf32>
    %c2_i32_46 = arith.constant 2 : i32
    %71 = vector.broadcast %c2_i32_46 : i32 to vector<2x16x1xi32>
    %72 = arith.cmpi sge, %0, %71 : vector<2x16x1xi32>
    %cst_47 = arith.constant 0.000000e+00 : f32
    %73 = vector.shape_cast %72 : vector<2x16x1xi1> to vector<2x16x1xi1>
    %74 = vector.broadcast %73 : vector<2x16x1xi1> to vector<2x16x128xi1>
    %75 = vector.broadcast %cst_47 : f32 to vector<2x16x128xf32>
    %76 = arith.select %74, %70, %75 : vector<2x16x128xi1>, vector<2x16x128xf32>
    %77 = vector.shape_cast %76 : vector<2x16x128xf32> to vector<32x128xf32>
    %78 = arith.addf %65, %77 : vector<32x128xf32>
    %cst_48 = arith.constant 0.000000e+00 : f32
    %79 = vector.broadcast %cst_48 : f32 to vector<32x128xf32>
    %80 = arith.maximumf %78, %79 : vector<32x128xf32>
    %81 = arith.truncf %80 : vector<32x128xf32> to vector<32x128xbf16>
    %c1_49 = arith.constant 1 : index
    %c0_50 = arith.constant 0 : index
    %c0_51 = arith.constant 0 : index
    %82 = vector.load %arg5[%c1_49, %c0_50, %c0_51] : memref<3x1x128xf32, #tpu.memory_space<vmem>>, vector<1x1x128xf32>
    %83 = vector.shape_cast %82 : vector<1x1x128xf32> to vector<1x128xf32>
    %c3_52 = arith.constant 3 : index
    %c0_53 = arith.constant 0 : index
    %c0_54 = arith.constant 0 : index
    %84 = vector.load %arg4[%c3_52, %c0_53, %c0_54] : memref<6x128x128xbf16, #tpu.memory_space<vmem>>, vector<1x128x128xbf16>
    %85 = vector.shape_cast %84 : vector<1x128x128xbf16> to vector<128x128xbf16>
    %cst_55 = arith.constant dense<0.000000e+00> : vector<32x128xf32>
    %86 = tpu.matmul %81, %85, %cst_55 {dimension_numbers = #tpu.dot_dimension_numbers<[1], [0], [0], [1], [0, 0, 1, 1], [], []>} : vector<32x128xbf16>, vector<128x128xbf16>, vector<32x128xf32> -> vector<32x128xf32>
    %87 = vector.broadcast %83 : vector<1x128xf32> to vector<32x128xf32>
    %88 = arith.addf %86, %87 : vector<32x128xf32>
    %c2_56 = arith.constant 2 : index
    %c0_57 = arith.constant 0 : index
    %c0_58 = arith.constant 0 : index
    %89 = vector.load %arg4[%c2_56, %c0_57, %c0_58] : memref<6x128x128xbf16, #tpu.memory_space<vmem>>, vector<1x128x128xbf16>
    %90 = vector.shape_cast %89 : vector<1x128x128xbf16> to vector<128x128xbf16>
    %cst_59 = arith.constant dense<0.000000e+00> : vector<32x128xf32>
    %91 = tpu.matmul %81, %90, %cst_59 {dimension_numbers = #tpu.dot_dimension_numbers<[1], [0], [0], [1], [0, 0, 1, 1], [], []>} : vector<32x128xbf16>, vector<128x128xbf16>, vector<32x128xf32> -> vector<32x128xf32>
    %92 = vector.shape_cast %91 : vector<32x128xf32> to vector<2x16x128xf32>
    %c2_i32_60 = arith.constant 2 : i32
    %93 = tpu.dynamic_rotate %92 by %c2_i32_60 dim 1 : vector<2x16x128xf32>, i32 -> vector<2x16x128xf32>
    %c2_i32_61 = arith.constant 2 : i32
    %94 = vector.broadcast %c2_i32_61 : i32 to vector<2x16x1xi32>
    %95 = arith.cmpi sge, %0, %94 : vector<2x16x1xi32>
    %cst_62 = arith.constant 0.000000e+00 : f32
    %96 = vector.shape_cast %95 : vector<2x16x1xi1> to vector<2x16x1xi1>
    %97 = vector.broadcast %96 : vector<2x16x1xi1> to vector<2x16x128xi1>
    %98 = vector.broadcast %cst_62 : f32 to vector<2x16x128xf32>
    %99 = arith.select %97, %93, %98 : vector<2x16x128xi1>, vector<2x16x128xf32>
    %100 = vector.shape_cast %99 : vector<2x16x128xf32> to vector<32x128xf32>
    %101 = arith.addf %88, %100 : vector<32x128xf32>
    %cst_63 = arith.constant 0.000000e+00 : f32
    %102 = vector.broadcast %cst_63 : f32 to vector<32x128xf32>
    %103 = arith.maximumf %101, %102 : vector<32x128xf32>
    %104 = arith.extf %58 : vector<32x128xbf16> to vector<32x128xf32>
    %105 = arith.addf %103, %104 : vector<32x128xf32>
    %cst_64 = arith.constant 0.000000e+00 : f32
    %106 = vector.broadcast %cst_64 : f32 to vector<32x128xf32>
    %107 = arith.maximumf %105, %106 : vector<32x128xf32>
    %108 = arith.truncf %107 : vector<32x128xf32> to vector<32x128xbf16>
    %c2_65 = arith.constant 2 : index
    %c0_66 = arith.constant 0 : index
    %c0_67 = arith.constant 0 : index
    %109 = vector.load %arg3[%c2_65, %c0_66, %c0_67] : memref<3x1x128xf32, #tpu.memory_space<vmem>>, vector<1x1x128xf32>
    %110 = vector.shape_cast %109 : vector<1x1x128xf32> to vector<1x128xf32>
    %c5 = arith.constant 5 : index
    %c0_68 = arith.constant 0 : index
    %c0_69 = arith.constant 0 : index
    %111 = vector.load %arg2[%c5, %c0_68, %c0_69] : memref<6x128x128xbf16, #tpu.memory_space<vmem>>, vector<1x128x128xbf16>
    %112 = vector.shape_cast %111 : vector<1x128x128xbf16> to vector<128x128xbf16>
    %cst_70 = arith.constant dense<0.000000e+00> : vector<32x128xf32>
    %113 = tpu.matmul %108, %112, %cst_70 {dimension_numbers = #tpu.dot_dimension_numbers<[1], [0], [0], [1], [0, 0, 1, 1], [], []>} : vector<32x128xbf16>, vector<128x128xbf16>, vector<32x128xf32> -> vector<32x128xf32>
    %114 = vector.broadcast %110 : vector<1x128xf32> to vector<32x128xf32>
    %115 = arith.addf %113, %114 : vector<32x128xf32>
    %c4 = arith.constant 4 : index
    %c0_71 = arith.constant 0 : index
    %c0_72 = arith.constant 0 : index
    %116 = vector.load %arg2[%c4, %c0_71, %c0_72] : memref<6x128x128xbf16, #tpu.memory_space<vmem>>, vector<1x128x128xbf16>
    %117 = vector.shape_cast %116 : vector<1x128x128xbf16> to vector<128x128xbf16>
    %cst_73 = arith.constant dense<0.000000e+00> : vector<32x128xf32>
    %118 = tpu.matmul %108, %117, %cst_73 {dimension_numbers = #tpu.dot_dimension_numbers<[1], [0], [0], [1], [0, 0, 1, 1], [], []>} : vector<32x128xbf16>, vector<128x128xbf16>, vector<32x128xf32> -> vector<32x128xf32>
    %119 = vector.shape_cast %118 : vector<32x128xf32> to vector<2x16x128xf32>
    %c4_i32 = arith.constant 4 : i32
    %120 = tpu.dynamic_rotate %119 by %c4_i32 dim 1 : vector<2x16x128xf32>, i32 -> vector<2x16x128xf32>
    %c4_i32_74 = arith.constant 4 : i32
    %121 = vector.broadcast %c4_i32_74 : i32 to vector<2x16x1xi32>
    %122 = arith.cmpi sge, %0, %121 : vector<2x16x1xi32>
    %cst_75 = arith.constant 0.000000e+00 : f32
    %123 = vector.shape_cast %122 : vector<2x16x1xi1> to vector<2x16x1xi1>
    %124 = vector.broadcast %123 : vector<2x16x1xi1> to vector<2x16x128xi1>
    %125 = vector.broadcast %cst_75 : f32 to vector<2x16x128xf32>
    %126 = arith.select %124, %120, %125 : vector<2x16x128xi1>, vector<2x16x128xf32>
    %127 = vector.shape_cast %126 : vector<2x16x128xf32> to vector<32x128xf32>
    %128 = arith.addf %115, %127 : vector<32x128xf32>
    %cst_76 = arith.constant 0.000000e+00 : f32
    %129 = vector.broadcast %cst_76 : f32 to vector<32x128xf32>
    %130 = arith.maximumf %128, %129 : vector<32x128xf32>
    %131 = arith.truncf %130 : vector<32x128xf32> to vector<32x128xbf16>
    %c2_77 = arith.constant 2 : index
    %c0_78 = arith.constant 0 : index
    %c0_79 = arith.constant 0 : index
    %132 = vector.load %arg5[%c2_77, %c0_78, %c0_79] : memref<3x1x128xf32, #tpu.memory_space<vmem>>, vector<1x1x128xf32>
    %133 = vector.shape_cast %132 : vector<1x1x128xf32> to vector<1x128xf32>
    %c5_80 = arith.constant 5 : index
    %c0_81 = arith.constant 0 : index
    %c0_82 = arith.constant 0 : index
    %134 = vector.load %arg4[%c5_80, %c0_81, %c0_82] : memref<6x128x128xbf16, #tpu.memory_space<vmem>>, vector<1x128x128xbf16>
    %135 = vector.shape_cast %134 : vector<1x128x128xbf16> to vector<128x128xbf16>
    %cst_83 = arith.constant dense<0.000000e+00> : vector<32x128xf32>
    %136 = tpu.matmul %131, %135, %cst_83 {dimension_numbers = #tpu.dot_dimension_numbers<[1], [0], [0], [1], [0, 0, 1, 1], [], []>} : vector<32x128xbf16>, vector<128x128xbf16>, vector<32x128xf32> -> vector<32x128xf32>
    %137 = vector.broadcast %133 : vector<1x128xf32> to vector<32x128xf32>
    %138 = arith.addf %136, %137 : vector<32x128xf32>
    %c4_84 = arith.constant 4 : index
    %c0_85 = arith.constant 0 : index
    %c0_86 = arith.constant 0 : index
    %139 = vector.load %arg4[%c4_84, %c0_85, %c0_86] : memref<6x128x128xbf16, #tpu.memory_space<vmem>>, vector<1x128x128xbf16>
    %140 = vector.shape_cast %139 : vector<1x128x128xbf16> to vector<128x128xbf16>
    %cst_87 = arith.constant dense<0.000000e+00> : vector<32x128xf32>
    %141 = tpu.matmul %131, %140, %cst_87 {dimension_numbers = #tpu.dot_dimension_numbers<[1], [0], [0], [1], [0, 0, 1, 1], [], []>} : vector<32x128xbf16>, vector<128x128xbf16>, vector<32x128xf32> -> vector<32x128xf32>
    %142 = vector.shape_cast %141 : vector<32x128xf32> to vector<2x16x128xf32>
    %c4_i32_88 = arith.constant 4 : i32
    %143 = tpu.dynamic_rotate %142 by %c4_i32_88 dim 1 : vector<2x16x128xf32>, i32 -> vector<2x16x128xf32>
    %c4_i32_89 = arith.constant 4 : i32
    %144 = vector.broadcast %c4_i32_89 : i32 to vector<2x16x1xi32>
    %145 = arith.cmpi sge, %0, %144 : vector<2x16x1xi32>
    %cst_90 = arith.constant 0.000000e+00 : f32
    %146 = vector.shape_cast %145 : vector<2x16x1xi1> to vector<2x16x1xi1>
    %147 = vector.broadcast %146 : vector<2x16x1xi1> to vector<2x16x128xi1>
    %148 = vector.broadcast %cst_90 : f32 to vector<2x16x128xf32>
    %149 = arith.select %147, %143, %148 : vector<2x16x128xi1>, vector<2x16x128xf32>
    %150 = vector.shape_cast %149 : vector<2x16x128xf32> to vector<32x128xf32>
    %151 = arith.addf %138, %150 : vector<32x128xf32>
    %cst_91 = arith.constant 0.000000e+00 : f32
    %152 = vector.broadcast %cst_91 : f32 to vector<32x128xf32>
    %153 = arith.maximumf %151, %152 : vector<32x128xf32>
    %154 = arith.extf %108 : vector<32x128xbf16> to vector<32x128xf32>
    %155 = arith.addf %153, %154 : vector<32x128xf32>
    %cst_92 = arith.constant 0.000000e+00 : f32
    %156 = vector.broadcast %cst_92 : f32 to vector<32x128xf32>
    %157 = arith.maximumf %155, %156 : vector<32x128xf32>
    %158 = vector.shape_cast %157 : vector<32x128xf32> to vector<2x16x128xf32>
    %c0_93 = arith.constant 0 : index
    %c0_94 = arith.constant 0 : index
    %c0_95 = arith.constant 0 : index
    %159 = vector.load %arg8[%c0_93, %c0_94, %c0_95] : memref<2x16x128xf32, #tpu.memory_space<vmem>>, vector<2x16x128xf32>
    tpu.vector_store %arg8[%c0_93, %c0_94, %c0_95], %158 {strides = array<i32>} : memref<2x16x128xf32, #tpu.memory_space<vmem>>, vector<2x16x128xf32>,
    return
  }
  func.func @transform_0(%arg0: i32) -> (i32, i32, i32) {
    %c0_i32 = arith.constant 0 : i32
    %c0_i32_0 = arith.constant 0 : i32
    %c0_i32_1 = arith.constant 0 : i32
    return %arg0, %c0_i32, %c0_i32_0 : i32, i32, i32
  }
  func.func @transform_1(%arg0: i32) -> (i32, i32, i32) {
    %c0_i32 = arith.constant 0 : i32
    %c0_i32_0 = arith.constant 0 : i32
    %c0_i32_1 = arith.constant 0 : i32
    %c0_i32_2 = arith.constant 0 : i32
    return %c0_i32, %c0_i32_0, %c0_i32_1 : i32, i32, i32
  }
  func.func @transform_2(%arg0: i32) -> (i32, i32, i32) {
    %c0_i32 = arith.constant 0 : i32
    %c0_i32_0 = arith.constant 0 : i32
    %c0_i32_1 = arith.constant 0 : i32
    %c0_i32_2 = arith.constant 0 : i32
    return %c0_i32, %c0_i32_0, %c0_i32_1 : i32, i32, i32
  }
  func.func @transform_3(%arg0: i32) -> (i32, i32, i32) {
    %c0_i32 = arith.constant 0 : i32
    %c0_i32_0 = arith.constant 0 : i32
    %c0_i32_1 = arith.constant 0 : i32
    %c0_i32_2 = arith.constant 0 : i32
    return %c0_i32, %c0_i32_0, %c0_i32_1 : i32, i32, i32
  }
  func.func @transform_4(%arg0: i32) -> (i32, i32, i32) {
    %c0_i32 = arith.constant 0 : i32
    %c0_i32_0 = arith.constant 0 : i32
    %c0_i32_1 = arith.constant 0 : i32
    %c0_i32_2 = arith.constant 0 : i32
    return %c0_i32, %c0_i32_0, %c0_i32_1 : i32, i32, i32
  }
  func.func @transform_5(%arg0: i32) -> (i32, i32, i32) {
    %c0_i32 = arith.constant 0 : i32
    %c0_i32_0 = arith.constant 0 : i32
    %c0_i32_1 = arith.constant 0 : i32
    %c0_i32_2 = arith.constant 0 : i32
    return %c0_i32, %c0_i32_0, %c0_i32_1 : i32, i32, i32
  }
  func.func @transform_6(%arg0: i32) -> (i32, i32, i32) {
    %c0_i32 = arith.constant 0 : i32
    %c0_i32_0 = arith.constant 0 : i32
    %c0_i32_1 = arith.constant 0 : i32
    %c0_i32_2 = arith.constant 0 : i32
    return %c0_i32, %c0_i32_0, %c0_i32_1 : i32, i32, i32
  }
  func.func @transform_7(%arg0: i32) -> (i32, i32, i32) {
    %c0_i32 = arith.constant 0 : i32
    %c0_i32_0 = arith.constant 0 : i32
    %c0_i32_1 = arith.constant 0 : i32
    return %arg0, %c0_i32, %c0_i32_0 : i32, i32, i32
  }
}

</mosaic_0001>

<llo_original>
// kernel: tpu_custom_call.1
$region0: #{tpu_custom_call.1}
  #allocation0 [shape = 'u32[]', space=smem, size = 0x4, offset = 0x4, fixed_abs, tag = 'smem constant byte address 0x4 - core index']
  #allocation1 [shape = 'u32[144,128]{1,0:T(1,128)}', space=vmem, size = 0x12000, scoped, tag = 'internal scratch']
  %s0 = inlined_call_operand.hbm [shape: bf16[2,16,128], index: 0, kind: input, shape index: {}]
  %s1 = inlined_call_operand.hbm [shape: bf16[6,128,128], index: 1, kind: input, shape index: {}]
  %s2 = inlined_call_operand.vmem [shape: f32[3,1,128], index: 2, kind: input, shape index: {}]
  %s3 = inlined_call_operand.hbm [shape: bf16[6,128,128], index: 3, kind: input, shape index: {}]
  %s4 = inlined_call_operand.vmem [shape: f32[3,1,128], index: 4, kind: input, shape index: {}]
  %s5 = inlined_call_operand.hbm [shape: bf16[1,128,128], index: 5, kind: input, shape index: {}]
  %s6 = inlined_call_operand.vmem [shape: f32[1,1,128], index: 6, kind: input, shape index: {}]
  %s7 = inlined_call_operand.hbm [shape: f32[2,16,128], index: 7, kind: output, shape index: {}]
  %s8 = sld [smem:[#allocation0]]
  $region54: #{tpu_custom_call.1} parent=0
    _
  %s10 = ssub.s32 1, %s8
  %s11 = scalar_select 0, %s10, %s8
  $region1: #{tpu_custom_call.1} parent=0
    #allocation2 [shape = 'u8[8192]{0}', space=vmem, size = 0x2000, scoped, tag = 'input window, operand 0, single buffered']
    #allocation3 [shape = 's32[1]{0}', space=sflag, size = 0x4, scoped, tag = 'scoped memory for tpu_custom_call.1']
    #allocation4 [shape = 's32[1]{0}', space=sflag, size = 0x4, scoped, tag = 'scoped memory for tpu_custom_call.1']
    #allocation5 [shape = 'u8[196608]{0}', space=vmem, size = 0x30000, scoped, tag = 'input window, operand 1, single buffered']
    #allocation6 [shape = 's32[1]{0}', space=sflag, size = 0x4, scoped, tag = 'scoped memory for tpu_custom_call.1']
    #allocation7 [shape = 'u8[196608]{0}', space=vmem, size = 0x30000, scoped, tag = 'input window, operand 3, single buffered']
    #allocation8 [shape = 'u8[32768]{0}', space=vmem, size = 0x8000, scoped, tag = 'input window, operand 5, single buffered']
    #allocation9 [shape = 's32[1]{0}', space=sflag, size = 0x4, scoped, tag = 'scoped memory for tpu_custom_call.1']
    #allocation10 [shape = 'u8[16384]{0}', space=vmem, size = 0x4000, scoped, tag = 'output window, operand 0, single buffered']
    %12 = vsyncpa [#allocation3], 0
    %13 = vsyncpa [#allocation6], 0
    %14 = vsyncpa [#allocation9], 0
    %15 = vsyncpa [#allocation4], 0
    // Predicated region
    $region2: #{tpu_custom_call.1} parent=1 // pred_check
      _
    $region3: #{tpu_custom_call.1} parent=1 // pred_check_branch
      %17 = sbr.rel (0) target = $region5
    $region4: #{tpu_custom_call.1} parent=1 // pred_region
      %s19 = ssub.s32 256, 256
      %20 = vsyncadd [#allocation3], %s19
      %s21 = sshll.u32 [#allocation2], 4
      %s22 = int_to_ptr.vmem [resolvable:$true] %s21
      %27 = dma.hbm_to_vmem [thread:$0]  %s0, 256, %s22, [#allocation3], 64, 64, 4
    $region5: #{tpu_custom_call.1} parent=1 // pred_fallthru
      _
    // Predicated region
    $region6: #{tpu_custom_call.1} parent=1 // pred_check
      _
    $region7: #{tpu_custom_call.1} parent=1 // pred_check_branch
      %29 = sbr.rel (0) target = $region9
    $region8: #{tpu_custom_call.1} parent=1 // pred_region
      %s31 = ssub.s32 6144, 6144
      %32 = vsyncadd [#allocation6], %s31
      %s33 = sshll.u32 [#allocation5], 4
      %s34 = int_to_ptr.vmem [resolvable:$true] %s33
      %39 = dma.hbm_to_vmem [thread:$0]  %s1, 6144, %s34, [#allocation6], 64, 64, 4
    $region9: #{tpu_custom_call.1} parent=1 // pred_fallthru
      _
    // Predicated region
    $region10: #{tpu_custom_call.1} parent=1 // pred_check
      _
    $region11: #{tpu_custom_call.1} parent=1 // pred_check_branch
      %41 = sbr.rel (0) target = $region13
    $region12: #{tpu_custom_call.1} parent=1 // pred_region
      _
    $region13: #{tpu_custom_call.1} parent=1 // pred_fallthru
      _
    // Predicated region
    $region14: #{tpu_custom_call.1} parent=1 // pred_check
      _
    $region15: #{tpu_custom_call.1} parent=1 // pred_check_branch
      %43 = sbr.rel (0) target = $region17
    $region16: #{tpu_custom_call.1} parent=1 // pred_region
      %s45 = ssub.s32 6144, 6144
      %46 = vsyncadd [#allocation6], %s45
      %s47 = sshll.u32 [#allocation7], 4
      %s48 = int_to_ptr.vmem [resolvable:$true] %s47
      %53 = dma.hbm_to_vmem [thread:$0]  %s3, 6144, %s48, [#allocation6], 64, 64, 4
    $region17: #{tpu_custom_call.1} parent=1 // pred_fallthru
      _
    // Predicated region
    $region18: #{tpu_custom_call.1} parent=1 // pred_check
      _
    $region19: #{tpu_custom_call.1} parent=1 // pred_check_branch
      %55 = sbr.rel (0) target = $region21
    $region20: #{tpu_custom_call.1} parent=1 // pred_region
      _
    $region21: #{tpu_custom_call.1} parent=1 // pred_fallthru
      _
    // Predicated region
    $region22: #{tpu_custom_call.1} parent=1 // pred_check
      _
    $region23: #{tpu_custom_call.1} parent=1 // pred_check_branch
      %57 = sbr.rel (0) target = $region25
    $region24: #{tpu_custom_call.1} parent=1 // pred_region
      %s59 = ssub.s32 1024, 1024
      %60 = vsyncadd [#allocation9], %s59
      %s61 = sshll.u32 [#allocation8], 4
      %s62 = int_to_ptr.vmem [resolvable:$true] %s61
      %67 = dma.hbm_to_vmem [thread:$0]  %s5, 1024, %s62, [#allocation9], 64, 64, 4
    $region25: #{tpu_custom_call.1} parent=1 // pred_fallthru
      _
    // Predicated region
    $region26: #{tpu_custom_call.1} parent=1 // pred_check
      _
    $region27: #{tpu_custom_call.1} parent=1 // pred_check_branch
      %69 = sbr.rel (0) target = $region29
    $region28: #{tpu_custom_call.1} parent=1 // pred_region
      _
    $region29: #{tpu_custom_call.1} parent=1 // pred_fallthru
      _
    // Predicated region
    $region30: #{tpu_custom_call.1} parent=1 // pred_check
      _
    $region31: #{tpu_custom_call.1} parent=1 // pred_check_branch
      %71 = sbr.rel (0) target = $region33
    $region32: #{tpu_custom_call.1} parent=1 // pred_region
      %72 = dma.done [#allocation3], 256
    $region33: #{tpu_custom_call.1} parent=1 // pred_fallthru
      _
    // Predicated region
    $region34: #{tpu_custom_call.1} parent=1 // pred_check
      _
    $region35: #{tpu_custom_call.1} parent=1 // pred_check_branch
      %74 = sbr.rel (0) target = $region37
    $region36: #{tpu_custom_call.1} parent=1 // pred_region
      %75 = dma.done [#allocation6], 6144
    $region37: #{tpu_custom_call.1} parent=1 // pred_fallthru
      _
    // Predicated region
    $region38: #{tpu_custom_call.1} parent=1 // pred_check
      _
    $region39: #{tpu_custom_call.1} parent=1 // pred_check_branch
      %77 = sbr.rel (0) target = $region41
    $region40: #{tpu_custom_call.1} parent=1 // pred_region
      %78 = dma.done [#allocation6], 6144
    $region41: #{tpu_custom_call.1} parent=1 // pred_fallthru
      _
    // Predicated region
    $region42: #{tpu_custom_call.1} parent=1 // pred_check
      _
    $region43: #{tpu_custom_call.1} parent=1 // pred_check_branch
      %80 = sbr.rel (0) target = $region45
    $region44: #{tpu_custom_call.1} parent=1 // pred_region
      %81 = dma.done [#allocation9], 1024
    $region45: #{tpu_custom_call.1} parent=1 // pred_fallthru
      _
    %v83 = vlaneseq
    %v84 = vshrl.u32 %v83, 7
    %v85 = vadd.s32 %v84, 8
    %v86 = vld [vmem:[#allocation2] sm:$0xf]
    %v87 = vld [vmem:[#allocation2 + $0x4] sm:$0xf]
    %v88 = vld [vmem:[#allocation2 + $0x8] sm:$0xf]
    %v89 = vld [vmem:[#allocation2 + $0xc] sm:$0xf]
    %v90 = vld [vmem:[%s2] sm:$0x1]
    %s91 = scalar_lea.vmem [#allocation5], 64
    %v92 = vld [vmem:[%s91] sm:$0xf]
    %v93 = vld [vmem:[%s91 + $0x4] sm:$0xf]
    %v94 = vld [vmem:[%s91 + $0x8] sm:$0xf]
    %v95 = vld [vmem:[%s91 + $0xc] sm:$0xf]
    %v96 = vld [vmem:[%s91 + $0x10] sm:$0xf]
    %v97 = vld [vmem:[%s91 + $0x14] sm:$0xf]
    %v98 = vld [vmem:[%s91 + $0x18] sm:$0xf]
    %v99 = vld [vmem:[%s91 + $0x1c] sm:$0xf]
    %v100 = vld [vmem:[%s91 + $0x20] sm:$0xf]
    %v101 = vld [vmem:[%s91 + $0x24] sm:$0xf]
    %v102 = vld [vmem:[%s91 + $0x28] sm:$0xf]
    %v103 = vld [vmem:[%s91 + $0x2c] sm:$0xf]
    %v104 = vld [vmem:[%s91 + $0x30] sm:$0xf]
    %v105 = vld [vmem:[%s91 + $0x34] sm:$0xf]
    %v106 = vld [vmem:[%s91 + $0x38] sm:$0xf]
    %v107 = vld [vmem:[%s91 + $0x3c] sm:$0xf]
    %v109 = vlaneseq
    %v110 = vshrl.u32 %v109, 7
    %v111 = vsub.s32 0, %v110
    %v112 = vrot.slane %v90, %v111
    %v118 = vunpack.c.l.b16 %v86
    %v119 = vunpack.c.l.b16 %v87
    %v120 = vunpack.c.l.b16 %v88
    %v121 = vunpack.c.l.b16 %v89
    %v122 = vpack.c.b16 %v119, %v118
    %v123 = vpack.c.b16 %v121, %v120
    %v142 = vunpack.c.l.b16 %v92
    %v143 = vunpack.c.l.b16 %v93
    %v144 = vunpack.c.l.b16 %v94
    %v145 = vunpack.c.l.b16 %v95
    %v146 = vunpack.c.l.b16 %v96
    %v147 = vunpack.c.l.b16 %v97
    %v148 = vunpack.c.l.b16 %v98
    %v149 = vunpack.c.l.b16 %v99
    %v150 = vunpack.c.l.b16 %v100
    %v151 = vunpack.c.l.b16 %v101
    %v152 = vunpack.c.l.b16 %v102
    %v153 = vunpack.c.l.b16 %v103
    %v154 = vunpack.c.l.b16 %v104
    %v155 = vunpack.c.l.b16 %v105
    %v156 = vunpack.c.l.b16 %v106
    %v157 = vunpack.c.l.b16 %v107
    %v158 = vpack.c.b16 %v143, %v142
    %v159 = vpack.c.b16 %v145, %v144
    %v160 = vpack.c.b16 %v147, %v146
    %v161 = vpack.c.b16 %v149, %v148
    %v162 = vpack.c.b16 %v151, %v150
    %v163 = vpack.c.b16 %v153, %v152
    %v164 = vpack.c.b16 %v155, %v154
    %v165 = vpack.c.b16 %v157, %v156
    %174 = vmatprep.subr.bf16.mxu0 0
    %175 = vmatpush1.bf16.msra.mxu0 %v158
    %176 = vmatprep.subr.bf16.mxu0 0
    %177 = vmatpush1.bf16.msra.mxu0 %v159
    %178 = vmatprep.subr.bf16.mxu0 0
    %179 = vmatpush1.bf16.msra.mxu0 %v160
    %180 = vmatprep.subr.bf16.mxu0 0
    %181 = vmatpush1.bf16.msra.mxu0 %v161
    %182 = vmatprep.subr.bf16.mxu0 0
    %183 = vmatpush1.bf16.msra.mxu0 %v162
    %184 = vmatprep.subr.bf16.mxu0 0
    %185 = vmatpush1.bf16.msra.mxu0 %v163
    %186 = vmatprep.subr.bf16.mxu0 0
    %187 = vmatpush1.bf16.msra.mxu0 %v164
    %188 = vmatprep.subr.bf16.mxu0 0
    %189 = vmatpush1.bf16.msra.mxu0 %v165
    %190 = vmatprep.subr.bf16.mxu0 0
    %191 = vmatpush1.bf16.msra.mxu0 0
    %192 = vmatprep.subr.bf16.mxu0 0
    %193 = vmatpush1.bf16.msra.mxu0 0
    %194 = vmatprep.subr.bf16.mxu0 0
    %195 = vmatpush1.bf16.msra.mxu0 0
    %196 = vmatprep.subr.bf16.mxu0 0
    %197 = vmatpush1.bf16.msra.mxu0 0
    %198 = vmatprep.subr.bf16.mxu0 0
    %199 = vmatpush1.bf16.msra.mxu0 0
    %200 = vmatprep.subr.bf16.mxu0 0
    %201 = vmatpush1.bf16.msra.mxu0 0
    %202 = vmatprep.subr.bf16.mxu0 0
    %203 = vmatpush1.bf16.msra.mxu0 0
    %204 = vmatprep.subr.bf16.mxu0 0
    %205 = vmatpush1.bf16.msra.mxu0 0
    %206 = vmatprep.mubr.bf16.mxu0 0
    %207 = vmatmul.mubr.bf16.gmra.mrb[0].mxu0 %v122
    %v208 = vpop.f32.mrb[0].mxu0
    %v209 = vadd.f32 %v112, %v208
    %v210 = vpop.f32.mrb[0].mxu0
    %v211 = vpop.f32.mrb[0].mxu0
    %v212 = vadd.f32 %v112, %v211
    %v213 = vpop.f32.mrb[0].mxu0
    %214 = vmatprep.mubr.bf16.mxu0 0
    %215 = vmatmul.mubr.bf16.gmra.mrb[0].mxu0 %v123
    %v216 = vpop.f32.mrb[0].mxu0
    %v217 = vadd.f32 %v112, %v216
    %v218 = vpop.f32.mrb[0].mxu0
    %v219 = vpop.f32.mrb[0].mxu0
    %v220 = vadd.f32 %v112, %v219
    %v221 = vpop.f32.mrb[0].mxu0
    %222 = vdwg.mxu0
    %v223 = vld [vmem:[#allocation5] sm:$0xf]
    %v224 = vld [vmem:[#allocation5 + $0x4] sm:$0xf]
    %v225 = vld [vmem:[#allocation5 + $0x8] sm:$0xf]
    %v226 = vld [vmem:[#allocation5 + $0xc] sm:$0xf]
    %v227 = vld [vmem:[#allocation5 + $0x10] sm:$0xf]
    %v228 = vld [vmem:[#allocation5 + $0x14] sm:$0xf]
    %v229 = vld [vmem:[#allocation5 + $0x18] sm:$0xf]
    %v230 = vld [vmem:[#allocation5 + $0x1c] sm:$0xf]
    %v231 = vld [vmem:[#allocation5 + $0x20] sm:$0xf]
    %v232 = vld [vmem:[#allocation5 + $0x24] sm:$0xf]
    %v233 = vld [vmem:[#allocation5 + $0x28] sm:$0xf]
    %v234 = vld [vmem:[#allocation5 + $0x2c] sm:$0xf]
    %v235 = vld [vmem:[#allocation5 + $0x30] sm:$0xf]
    %v236 = vld [vmem:[#allocation5 + $0x34] sm:$0xf]
    %v237 = vld [vmem:[#allocation5 + $0x38] sm:$0xf]
    %v238 = vld [vmem:[#allocation5 + $0x3c] sm:$0xf]
    %v255 = vunpack.c.l.b16 %v223
    %v256 = vunpack.c.l.b16 %v224
    %v257 = vunpack.c.l.b16 %v225
    %v258 = vunpack.c.l.b16 %v226
    %v259 = vunpack.c.l.b16 %v227
    %v260 = vunpack.c.l.b16 %v228
    %v261 = vunpack.c.l.b16 %v229
    %v262 = vunpack.c.l.b16 %v230
    %v263 = vunpack.c.l.b16 %v231
    %v264 = vunpack.c.l.b16 %v232
    %v265 = vunpack.c.l.b16 %v233
    %v266 = vunpack.c.l.b16 %v234
    %v267 = vunpack.c.l.b16 %v235
    %v268 = vunpack.c.l.b16 %v236
    %v269 = vunpack.c.l.b16 %v237
    %v270 = vunpack.c.l.b16 %v238
    %v271 = vpack.c.b16 %v256, %v255
    %v272 = vpack.c.b16 %v258, %v257
    %v273 = vpack.c.b16 %v260, %v259
    %v274 = vpack.c.b16 %v262, %v261
    %v275 = vpack.c.b16 %v264, %v263
    %v276 = vpack.c.b16 %v266, %v265
    %v277 = vpack.c.b16 %v268, %v267
    %v278 = vpack.c.b16 %v270, %v269
    %287 = vmatprep.subr.bf16.mxu0 0
    %288 = vmatpush1.bf16.msra.mxu0 %v271
    %289 = vmatprep.subr.bf16.mxu0 0
    %290 = vmatpush1.bf16.msra.mxu0 %v272
    %291 = vmatprep.subr.bf16.mxu0 0
    %292 = vmatpush1.bf16.msra.mxu0 %v273
    %293 = vmatprep.subr.bf16.mxu0 0
    %294 = vmatpush1.bf16.msra.mxu0 %v274
    %295 = vmatprep.subr.bf16.mxu0 0
    %296 = vmatpush1.bf16.msra.mxu0 %v275
    %297 = vmatprep.subr.bf16.mxu0 0
    %298 = vmatpush1.bf16.msra.mxu0 %v276
    %299 = vmatprep.subr.bf16.mxu0 0
    %300 = vmatpush1.bf16.msra.mxu0 %v277
    %301 = vmatprep.subr.bf16.mxu0 0
    %302 = vmatpush1.bf16.msra.mxu0 %v278
    %303 = vmatprep.subr.bf16.mxu0 0
    %304 = vmatpush1.bf16.msra.mxu0 0
    %305 = vmatprep.subr.bf16.mxu0 0
    %306 = vmatpush1.bf16.msra.mxu0 0
    %307 = vmatprep.subr.bf16.mxu0 0
    %308 = vmatpush1.bf16.msra.mxu0 0
    %309 = vmatprep.subr.bf16.mxu0 0
    %310 = vmatpush1.bf16.msra.mxu0 0
    %311 = vmatprep.subr.bf16.mxu0 0
    %312 = vmatpush1.bf16.msra.mxu0 0
    %313 = vmatprep.subr.bf16.mxu0 0
    %314 = vmatpush1.bf16.msra.mxu0 0
    %315 = vmatprep.subr.bf16.mxu0 0
    %316 = vmatpush1.bf16.msra.mxu0 0
    %317 = vmatprep.subr.bf16.mxu0 0
    %318 = vmatpush1.bf16.msra.mxu0 0
    %319 = vmatprep.mubr.bf16.mxu0 0
    %320 = vmatmul.mubr.bf16.gmra.mrb[0].mxu0 %v122
    %v321 = vpop.f32.mrb[0].mxu0
    %v322 = vadd.f32 0.0, %v321
    %v323 = vpop.f32.mrb[0].mxu0
    %v324 = vpop.f32.mrb[0].mxu0
    %v325 = vadd.f32 0.0, %v324
    %v326 = vpop.f32.mrb[0].mxu0
    %327 = vmatprep.mubr.bf16.mxu0 0
    %328 = vmatmul.mubr.bf16.gmra.mrb[0].mxu0 %v123
    %v329 = vpop.f32.mrb[0].mxu0
    %v330 = vadd.f32 0.0, %v329
    %v331 = vpop.f32.mrb[0].mxu0
    %v332 = vpop.f32.mrb[0].mxu0
    %v333 = vadd.f32 0.0, %v332
    %v334 = vpop.f32.mrb[0].mxu0
    %335 = vdwg.mxu0
    %v336 = vrot.slane %v322, 7
    %v337 = vrot.slane %v330, 7
    %v338 = vrot.slane %v325, 7
    %v339 = vrot.slane %v333, 7
    %vm340 = vcmp.lt.s32.totalorder %v84, 1
    %v341 = vsel %vm340, %v336, %v338
    %v342 = vsel %vm340, %v337, %v339
    %v343 = vsel %vm340, %v338, %v336
    %v344 = vsel %vm340, %v339, %v337
    %vm345 = vcmp.ge.s32.totalorder %v84, 1
    %vm346 = vcmp.ge.s32.totalorder %v85, 1
    %v347 = vsel %vm345, 1, 0
    %v348 = vsel %vm346, 1, 0
    %vm349 = vcmp.eq.s32.totalorder %v347, 1
    %vm350 = vcmp.eq.s32.totalorder %v348, 1
    %v351 = vsel %vm349, %v343, 0.0
    %v352 = vsel %vm350, %v341, 0.0
    %v353 = vsel %vm349, %v344, 0.0
    %v354 = vsel %vm350, %v342, 0.0
    %v355 = vadd.f32 %v209, %v351
    %v356 = vadd.f32 %v212, %v352
    %v357 = vadd.f32 %v217, %v353
    %v358 = vadd.f32 %v220, %v354
    %v359 = vmax.f32 %v355, 0.0
    %v360 = vmax.f32 %v356, 0.0
    %v361 = vmax.f32 %v357, 0.0
    %v362 = vmax.f32 %v358, 0.0
    %v363 = vpack.c.bf16 %v360, %v359
    %v364 = vpack.c.bf16 %v362, %v361
    %v365 = vld [vmem:[%s4] sm:$0x1]
    %s366 = scalar_lea.vmem [#allocation7], 64
    %v367 = vld [vmem:[%s366] sm:$0xf]
    %v368 = vld [vmem:[%s366 + $0x4] sm:$0xf]
    %v369 = vld [vmem:[%s366 + $0x8] sm:$0xf]
    %v370 = vld [vmem:[%s366 + $0xc] sm:$0xf]
    %v371 = vld [vmem:[%s366 + $0x10] sm:$0xf]
    %v372 = vld [vmem:[%s366 + $0x14] sm:$0xf]
    %v373 = vld [vmem:[%s366 + $0x18] sm:$0xf]
    %v374 = vld [vmem:[%s366 + $0x1c] sm:$0xf]
    %v375 = vld [vmem:[%s366 + $0x20] sm:$0xf]
    %v376 = vld [vmem:[%s366 + $0x24] sm:$0xf]
    %v377 = vld [vmem:[%s366 + $0x28] sm:$0xf]
    %v378 = vld [vmem:[%s366 + $0x2c] sm:$0xf]
    %v379 = vld [vmem:[%s366 + $0x30] sm:$0xf]
    %v380 = vld [vmem:[%s366 + $0x34] sm:$0xf]
    %v381 = vld [vmem:[%s366 + $0x38] sm:$0xf]
    %v382 = vld [vmem:[%s366 + $0x3c] sm:$0xf]
    %v384 = vlaneseq
    %v385 = vshrl.u32 %v384, 7
    %v386 = vsub.s32 0, %v385
    %v387 = vrot.slane %v365, %v386
    %v405 = vunpack.c.l.b16 %v367
    %v406 = vunpack.c.l.b16 %v368
    %v407 = vunpack.c.l.b16 %v369
    %v408 = vunpack.c.l.b16 %v370
    %v409 = vunpack.c.l.b16 %v371
    %v410 = vunpack.c.l.b16 %v372
    %v411 = vunpack.c.l.b16 %v373
    %v412 = vunpack.c.l.b16 %v374
    %v413 = vunpack.c.l.b16 %v375
    %v414 = vunpack.c.l.b16 %v376
    %v415 = vunpack.c.l.b16 %v377
    %v416 = vunpack.c.l.b16 %v378
    %v417 = vunpack.c.l.b16 %v379
    %v418 = vunpack.c.l.b16 %v380
    %v419 = vunpack.c.l.b16 %v381
    %v420 = vunpack.c.l.b16 %v382
    %v421 = vpack.c.b16 %v406, %v405
    %v422 = vpack.c.b16 %v408, %v407
    %v423 = vpack.c.b16 %v410, %v409
    %v424 = vpack.c.b16 %v412, %v411
    %v425 = vpack.c.b16 %v414, %v413
    %v426 = vpack.c.b16 %v416, %v415
    %v427 = vpack.c.b16 %v418, %v417
    %v428 = vpack.c.b16 %v420, %v419
    %437 = vmatprep.subr.bf16.mxu0 0
    %438 = vmatpush1.bf16.msra.mxu0 %v421
    %439 = vmatprep.subr.bf16.mxu0 0
    %440 = vmatpush1.bf16.msra.mxu0 %v422
    %441 = vmatprep.subr.bf16.mxu0 0
    %442 = vmatpush1.bf16.msra.mxu0 %v423
    %443 = vmatprep.subr.bf16.mxu0 0
    %444 = vmatpush1.bf16.msra.mxu0 %v424
    %445 = vmatprep.subr.bf16.mxu0 0
    %446 = vmatpush1.bf16.msra.mxu0 %v425
    %447 = vmatprep.subr.bf16.mxu0 0
    %448 = vmatpush1.bf16.msra.mxu0 %v426
    %449 = vmatprep.subr.bf16.mxu0 0
    %450 = vmatpush1.bf16.msra.mxu0 %v427
    %451 = vmatprep.subr.bf16.mxu0 0
    %452 = vmatpush1.bf16.msra.mxu0 %v428
    %453 = vmatprep.subr.bf16.mxu0 0
    %454 = vmatpush1.bf16.msra.mxu0 0
    %455 = vmatprep.subr.bf16.mxu0 0
    %456 = vmatpush1.bf16.msra.mxu0 0
    %457 = vmatprep.subr.bf16.mxu0 0
    %458 = vmatpush1.bf16.msra.mxu0 0
    %459 = vmatprep.subr.bf16.mxu0 0
    %460 = vmatpush1.bf16.msra.mxu0 0
    %461 = vmatprep.subr.bf16.mxu0 0
    %462 = vmatpush1.bf16.msra.mxu0 0
    %463 = vmatprep.subr.bf16.mxu0 0
    %464 = vmatpush1.bf16.msra.mxu0 0
    %465 = vmatprep.subr.bf16.mxu0 0
    %466 = vmatpush1.bf16.msra.mxu0 0
    %467 = vmatprep.subr.bf16.mxu0 0
    %468 = vmatpush1.bf16.msra.mxu0 0
    %469 = vmatprep.mubr.bf16.mxu0 0
    %470 = vmatmul.mubr.bf16.gmra.mrb[0].mxu0 %v363
    %v471 = vpop.f32.mrb[0].mxu0
    %v472 = vadd.f32 %v387, %v471
    %v473 = vpop.f32.mrb[0].mxu0
    %v474 = vpop.f32.mrb[0].mxu0
    %v475 = vadd.f32 %v387, %v474
    %v476 = vpop.f32.mrb[0].mxu0
    %477 = vmatprep.mubr.bf16.mxu0 0
    %478 = vmatmul.mubr.bf16.gmra.mrb[0].mxu0 %v364
    %v479 = vpop.f32.mrb[0].mxu0
    %v480 = vadd.f32 %v387, %v479
    %v481 = vpop.f32.mrb[0].mxu0
    %v482 = vpop.f32.mrb[0].mxu0
    %v483 = vadd.f32 %v387, %v482
    %v484 = vpop.f32.mrb[0].mxu0
    %485 = vdwg.mxu0
    %v486 = vld [vmem:[#allocation7] sm:$0xf]
    %v487 = vld [vmem:[#allocation7 + $0x4] sm:$0xf]
    %v488 = vld [vmem:[#allocation7 + $0x8] sm:$0xf]
    %v489 = vld [vmem:[#allocation7 + $0xc] sm:$0xf]
    %v490 = vld [vmem:[#allocation7 + $0x10] sm:$0xf]
    %v491 = vld [vmem:[#allocation7 + $0x14] sm:$0xf]
    %v492 = vld [vmem:[#allocation7 + $0x18] sm:$0xf]
    %v493 = vld [vmem:[#allocation7 + $0x1c] sm:$0xf]
    %v494 = vld [vmem:[#allocation7 + $0x20] sm:$0xf]
    %v495 = vld [vmem:[#allocation7 + $0x24] sm:$0xf]
    %v496 = vld [vmem:[#allocation7 + $0x28] sm:$0xf]
    %v497 = vld [vmem:[#allocation7 + $0x2c] sm:$0xf]
    %v498 = vld [vmem:[#allocation7 + $0x30] sm:$0xf]
    %v499 = vld [vmem:[#allocation7 + $0x34] sm:$0xf]
    %v500 = vld [vmem:[#allocation7 + $0x38] sm:$0xf]
    %v501 = vld [vmem:[#allocation7 + $0x3c] sm:$0xf]
    %v518 = vunpack.c.l.b16 %v486
    %v519 = vunpack.c.l.b16 %v487
    %v520 = vunpack.c.l.b16 %v488
    %v521 = vunpack.c.l.b16 %v489
    %v522 = vunpack.c.l.b16 %v490
    %v523 = vunpack.c.l.b16 %v491
    %v524 = vunpack.c.l.b16 %v492
    %v525 = vunpack.c.l.b16 %v493
    %v526 = vunpack.c.l.b16 %v494
    %v527 = vunpack.c.l.b16 %v495
    %v528 = vunpack.c.l.b16 %v496
    %v529 = vunpack.c.l.b16 %v497
    %v530 = vunpack.c.l.b16 %v498
    %v531 = vunpack.c.l.b16 %v499
    %v532 = vunpack.c.l.b16 %v500
    %v533 = vunpack.c.l.b16 %v501
    %v534 = vpack.c.b16 %v519, %v518
    %v535 = vpack.c.b16 %v521, %v520
    %v536 = vpack.c.b16 %v523, %v522
    %v537 = vpack.c.b16 %v525, %v524
    %v538 = vpack.c.b16 %v527, %v526
    %v539 = vpack.c.b16 %v529, %v528
    %v540 = vpack.c.b16 %v531, %v530
    %v541 = vpack.c.b16 %v533, %v532
    %550 = vmatprep.subr.bf16.mxu0 0
    %551 = vmatpush1.bf16.msra.mxu0 %v534
    %552 = vmatprep.subr.bf16.mxu0 0
    %553 = vmatpush1.bf16.msra.mxu0 %v535
    %554 = vmatprep.subr.bf16.mxu0 0
    %555 = vmatpush1.bf16.msra.mxu0 %v536
    %556 = vmatprep.subr.bf16.mxu0 0
    %557 = vmatpush1.bf16.msra.mxu0 %v537
    %558 = vmatprep.subr.bf16.mxu0 0
    %559 = vmatpush1.bf16.msra.mxu0 %v538
    %560 = vmatprep.subr.bf16.mxu0 0
    %561 = vmatpush1.bf16.msra.mxu0 %v539
    %562 = vmatprep.subr.bf16.mxu0 0
    %563 = vmatpush1.bf16.msra.mxu0 %v540
    %564 = vmatprep.subr.bf16.mxu0 0
    %565 = vmatpush1.bf16.msra.mxu0 %v541
    %566 = vmatprep.subr.bf16.mxu0 0
    %567 = vmatpush1.bf16.msra.mxu0 0
    %568 = vmatprep.subr.bf16.mxu0 0
    %569 = vmatpush1.bf16.msra.mxu0 0
    %570 = vmatprep.subr.bf16.mxu0 0
    %571 = vmatpush1.bf16.msra.mxu0 0
    %572 = vmatprep.subr.bf16.mxu0 0
    %573 = vmatpush1.bf16.msra.mxu0 0
    %574 = vmatprep.subr.bf16.mxu0 0
    %575 = vmatpush1.bf16.msra.mxu0 0
    %576 = vmatprep.subr.bf16.mxu0 0
    %577 = vmatpush1.bf16.msra.mxu0 0
    %578 = vmatprep.subr.bf16.mxu0 0
    %579 = vmatpush1.bf16.msra.mxu0 0
    %580 = vmatprep.subr.bf16.mxu0 0
    %581 = vmatpush1.bf16.msra.mxu0 0
    %582 = vmatprep.mubr.bf16.mxu0 0
    %583 = vmatmul.mubr.bf16.gmra.mrb[0].mxu0 %v363
    %v584 = vpop.f32.mrb[0].mxu0
    %v585 = vadd.f32 0.0, %v584
    %v586 = vpop.f32.mrb[0].mxu0
    %v587 = vpop.f32.mrb[0].mxu0
    %v588 = vadd.f32 0.0, %v587
    %v589 = vpop.f32.mrb[0].mxu0
    %590 = vmatprep.mubr.bf16.mxu0 0
    %591 = vmatmul.mubr.bf16.gmra.mrb[0].mxu0 %v364
    %v592 = vpop.f32.mrb[0].mxu0
    %v593 = vadd.f32 0.0, %v592
    %v594 = vpop.f32.mrb[0].mxu0
    %v595 = vpop.f32.mrb[0].mxu0
    %v596 = vadd.f32 0.0, %v595
    %v597 = vpop.f32.mrb[0].mxu0
    %598 = vdwg.mxu0
    %v599 = vrot.slane %v585, 7
    %v600 = vrot.slane %v593, 7
    %v601 = vrot.slane %v588, 7
    %v602 = vrot.slane %v596, 7
    %v603 = vsel %vm340, %v599, %v601
    %v604 = vsel %vm340, %v600, %v602
    %v605 = vsel %vm340, %v601, %v599
    %v606 = vsel %vm340, %v602, %v600
    %v607 = vsel %vm349, %v605, 0.0
    %v608 = vsel %vm350, %v603, 0.0
    %v609 = vsel %vm349, %v606, 0.0
    %v610 = vsel %vm350, %v604, 0.0
    %v611 = vadd.f32 %v472, %v607
    %v612 = vadd.f32 %v475, %v608
    %v613 = vadd.f32 %v480, %v609
    %v614 = vadd.f32 %v483, %v610
    %v615 = vmax.f32 %v611, 0.0
    %v616 = vmax.f32 %v612, 0.0
    %v617 = vmax.f32 %v613, 0.0
    %v618 = vmax.f32 %v614, 0.0
    %v619 = vld [vmem:[#allocation8] sm:$0xf]
    %v620 = vld [vmem:[#allocation8 + $0x4] sm:$0xf]
    %v621 = vld [vmem:[#allocation8 + $0x8] sm:$0xf]
    %v622 = vld [vmem:[#allocation8 + $0xc] sm:$0xf]
    %v623 = vld [vmem:[#allocation8 + $0x10] sm:$0xf]
    %v624 = vld [vmem:[#allocation8 + $0x14] sm:$0xf]
    %v625 = vld [vmem:[#allocation8 + $0x18] sm:$0xf]
    %v626 = vld [vmem:[#allocation8 + $0x1c] sm:$0xf]
    %v627 = vld [vmem:[#allocation8 + $0x20] sm:$0xf]
    %v628 = vld [vmem:[#allocation8 + $0x24] sm:$0xf]
    %v629 = vld [vmem:[#allocation8 + $0x28] sm:$0xf]
    %v630 = vld [vmem:[#allocation8 + $0x2c] sm:$0xf]
    %v631 = vld [vmem:[#allocation8 + $0x30] sm:$0xf]
    %v632 = vld [vmem:[#allocation8 + $0x34] sm:$0xf]
    %v633 = vld [vmem:[#allocation8 + $0x38] sm:$0xf]
    %v634 = vld [vmem:[#allocation8 + $0x3c] sm:$0xf]
    %v635 = vld [vmem:[%s6] sm:$0x1]
    %v637 = vlaneseq
    %v638 = vshrl.u32 %v637, 7
    %v639 = vsub.s32 0, %v638
    %v640 = vrot.slane %v635, %v639
    %v658 = vunpack.c.l.b16 %v619
    %v659 = vunpack.c.l.b16 %v620
    %v660 = vunpack.c.l.b16 %v621
    %v661 = vunpack.c.l.b16 %v622
    %v662 = vunpack.c.l.b16 %v623
    %v663 = vunpack.c.l.b16 %v624
    %v664 = vunpack.c.l.b16 %v625
    %v665 = vunpack.c.l.b16 %v626
    %v666 = vunpack.c.l.b16 %v627
    %v667 = vunpack.c.l.b16 %v628
    %v668 = vunpack.c.l.b16 %v629
    %v669 = vunpack.c.l.b16 %v630
    %v670 = vunpack.c.l.b16 %v631
    %v671 = vunpack.c.l.b16 %v632
    %v672 = vunpack.c.l.b16 %v633
    %v673 = vunpack.c.l.b16 %v634
    %v674 = vpack.c.b16 %v659, %v658
    %v675 = vpack.c.b16 %v661, %v660
    %v676 = vpack.c.b16 %v663, %v662
    %v677 = vpack.c.b16 %v665, %v664
    %v678 = vpack.c.b16 %v667, %v666
    %v679 = vpack.c.b16 %v669, %v668
    %v680 = vpack.c.b16 %v671, %v670
    %v681 = vpack.c.b16 %v673, %v672
    %690 = vmatprep.subr.bf16.mxu0 0
    %691 = vmatpush1.bf16.msra.mxu0 %v674
    %692 = vmatprep.subr.bf16.mxu0 0
    %693 = vmatpush1.bf16.msra.mxu0 %v675
    %694 = vmatprep.subr.bf16.mxu0 0
    %695 = vmatpush1.bf16.msra.mxu0 %v676
    %696 = vmatprep.subr.bf16.mxu0 0
    %697 = vmatpush1.bf16.msra.mxu0 %v677
    %698 = vmatprep.subr.bf16.mxu0 0
    %699 = vmatpush1.bf16.msra.mxu0 %v678
    %700 = vmatprep.subr.bf16.mxu0 0
    %701 = vmatpush1.bf16.msra.mxu0 %v679
    %702 = vmatprep.subr.bf16.mxu0 0
    %703 = vmatpush1.bf16.msra.mxu0 %v680
    %704 = vmatprep.subr.bf16.mxu0 0
    %705 = vmatpush1.bf16.msra.mxu0 %v681
    %706 = vmatprep.subr.bf16.mxu0 0
    %707 = vmatpush1.bf16.msra.mxu0 0
    %708 = vmatprep.subr.bf16.mxu0 0
    %709 = vmatpush1.bf16.msra.mxu0 0
    %710 = vmatprep.subr.bf16.mxu0 0
    %711 = vmatpush1.bf16.msra.mxu0 0
    %712 = vmatprep.subr.bf16.mxu0 0
    %713 = vmatpush1.bf16.msra.mxu0 0
    %714 = vmatprep.subr.bf16.mxu0 0
    %715 = vmatpush1.bf16.msra.mxu0 0
    %716 = vmatprep.subr.bf16.mxu0 0
    %717 = vmatpush1.bf16.msra.mxu0 0
    %718 = vmatprep.subr.bf16.mxu0 0
    %719 = vmatpush1.bf16.msra.mxu0 0
    %720 = vmatprep.subr.bf16.mxu0 0
    %721 = vmatpush1.bf16.msra.mxu0 0
    %722 = vmatprep.mubr.bf16.mxu0 0
    %723 = vmatmul.mubr.bf16.gmra.mrb[0].mxu0 %v122
    %v724 = vpop.f32.mrb[0].mxu0
    %v725 = vadd.f32 %v640, %v724
    %v726 = vpop.f32.mrb[0].mxu0
    %v727 = vpop.f32.mrb[0].mxu0
    %v728 = vadd.f32 %v640, %v727
    %v729 = vpop.f32.mrb[0].mxu0
    %730 = vmatprep.mubr.bf16.mxu0 0
    %731 = vmatmul.mubr.bf16.gmra.mrb[0].mxu0 %v123
    %v732 = vpop.f32.mrb[0].mxu0
    %v733 = vadd.f32 %v640, %v732
    %v734 = vpop.f32.mrb[0].mxu0
    %v735 = vpop.f32.mrb[0].mxu0
    %v736 = vadd.f32 %v640, %v735
    %v737 = vpop.f32.mrb[0].mxu0
    %738 = vdwg.mxu0
    %v739 = vadd.f32 %v615, %v725
    %v740 = vadd.f32 %v616, %v728
    %v741 = vadd.f32 %v617, %v733
    %v742 = vadd.f32 %v618, %v736
    %v743 = vmax.f32 %v739, 0.0
    %v744 = vmax.f32 %v740, 0.0
    %v745 = vmax.f32 %v741, 0.0
    %v746 = vmax.f32 %v742, 0.0
    %v747 = vpack.c.bf16 %v744, %v743
    %v748 = vpack.c.bf16 %v746, %v745
    %s749 = scalar_lea.vmem %s2, 1
    %v750 = vld [vmem:[%s749] sm:$0x1]
    %s751 = scalar_lea.vmem [#allocation5], 192
    %v752 = vld [vmem:[%s751] sm:$0xf]
    %v753 = vld [vmem:[%s751 + $0x4] sm:$0xf]
    %v754 = vld [vmem:[%s751 + $0x8] sm:$0xf]
    %v755 = vld [vmem:[%s751 + $0xc] sm:$0xf]
    %v756 = vld [vmem:[%s751 + $0x10] sm:$0xf]
    %v757 = vld [vmem:[%s751 + $0x14] sm:$0xf]
    %v758 = vld [vmem:[%s751 + $0x18] sm:$0xf]
    %v759 = vld [vmem:[%s751 + $0x1c] sm:$0xf]
    %v760 = vld [vmem:[%s751 + $0x20] sm:$0xf]
    %v761 = vld [vmem:[%s751 + $0x24] sm:$0xf]
    %v762 = vld [vmem:[%s751 + $0x28] sm:$0xf]
    %v763 = vld [vmem:[%s751 + $0x2c] sm:$0xf]
    %v764 = vld [vmem:[%s751 + $0x30] sm:$0xf]
    %v765 = vld [vmem:[%s751 + $0x34] sm:$0xf]
    %v766 = vld [vmem:[%s751 + $0x38] sm:$0xf]
    %v767 = vld [vmem:[%s751 + $0x3c] sm:$0xf]
    %v769 = vlaneseq
    %v770 = vshrl.u32 %v769, 7
    %v771 = vsub.s32 0, %v770
    %v772 = vrot.slane %v750, %v771
    %v790 = vunpack.c.l.b16 %v752
    %v791 = vunpack.c.l.b16 %v753
    %v792 = vunpack.c.l.b16 %v754
    %v793 = vunpack.c.l.b16 %v755
    %v794 = vunpack.c.l.b16 %v756
    %v795 = vunpack.c.l.b16 %v757
    %v796 = vunpack.c.l.b16 %v758
    %v797 = vunpack.c.l.b16 %v759
    %v798 = vunpack.c.l.b16 %v760
    %v799 = vunpack.c.l.b16 %v761
    %v800 = vunpack.c.l.b16 %v762
    %v801 = vunpack.c.l.b16 %v763
    %v802 = vunpack.c.l.b16 %v764
    %v803 = vunpack.c.l.b16 %v765
    %v804 = vunpack.c.l.b16 %v766
    %v805 = vunpack.c.l.b16 %v767
    %v806 = vpack.c.b16 %v791, %v790
    %v807 = vpack.c.b16 %v793, %v792
    %v808 = vpack.c.b16 %v795, %v794
    %v809 = vpack.c.b16 %v797, %v796
    %v810 = vpack.c.b16 %v799, %v798
    %v811 = vpack.c.b16 %v801, %v800
    %v812 = vpack.c.b16 %v803, %v802
    %v813 = vpack.c.b16 %v805, %v804
    %822 = vmatprep.subr.bf16.mxu0 0
    %823 = vmatpush1.bf16.msra.mxu0 %v806
    %824 = vmatprep.subr.bf16.mxu0 0
    %825 = vmatpush1.bf16.msra.mxu0 %v807
    %826 = vmatprep.subr.bf16.mxu0 0
    %827 = vmatpush1.bf16.msra.mxu0 %v808
    %828 = vmatprep.subr.bf16.mxu0 0
    %829 = vmatpush1.bf16.msra.mxu0 %v809
    %830 = vmatprep.subr.bf16.mxu0 0
    %831 = vmatpush1.bf16.msra.mxu0 %v810
    %832 = vmatprep.subr.bf16.mxu0 0
    %833 = vmatpush1.bf16.msra.mxu0 %v811
    %834 = vmatprep.subr.bf16.mxu0 0
    %835 = vmatpush1.bf16.msra.mxu0 %v812
    %836 = vmatprep.subr.bf16.mxu0 0
    %837 = vmatpush1.bf16.msra.mxu0 %v813
    %838 = vmatprep.subr.bf16.mxu0 0
    %839 = vmatpush1.bf16.msra.mxu0 0
    %840 = vmatprep.subr.bf16.mxu0 0
    %841 = vmatpush1.bf16.msra.mxu0 0
    %842 = vmatprep.subr.bf16.mxu0 0
    %843 = vmatpush1.bf16.msra.mxu0 0
    %844 = vmatprep.subr.bf16.mxu0 0
    %845 = vmatpush1.bf16.msra.mxu0 0
    %846 = vmatprep.subr.bf16.mxu0 0
    %847 = vmatpush1.bf16.msra.mxu0 0
    %848 = vmatprep.subr.bf16.mxu0 0
    %849 = vmatpush1.bf16.msra.mxu0 0
    %850 = vmatprep.subr.bf16.mxu0 0
    %851 = vmatpush1.bf16.msra.mxu0 0
    %852 = vmatprep.subr.bf16.mxu0 0
    %853 = vmatpush1.bf16.msra.mxu0 0
    %854 = vmatprep.mubr.bf16.mxu0 0
    %855 = vmatmul.mubr.bf16.gmra.mrb[0].mxu0 %v747
    %v856 = vpop.f32.mrb[0].mxu0
    %v857 = vadd.f32 %v772, %v856
    %v858 = vpop.f32.mrb[0].mxu0
    %v859 = vpop.f32.mrb[0].mxu0
    %v860 = vadd.f32 %v772, %v859
    %v861 = vpop.f32.mrb[0].mxu0
    %862 = vmatprep.mubr.bf16.mxu0 0
    %863 = vmatmul.mubr.bf16.gmra.mrb[0].mxu0 %v748
    %v864 = vpop.f32.mrb[0].mxu0
    %v865 = vadd.f32 %v772, %v864
    %v866 = vpop.f32.mrb[0].mxu0
    %v867 = vpop.f32.mrb[0].mxu0
    %v868 = vadd.f32 %v772, %v867
    %v869 = vpop.f32.mrb[0].mxu0
    %870 = vdwg.mxu0
    %s871 = scalar_lea.vmem [#allocation5], 128
    %v872 = vld [vmem:[%s871] sm:$0xf]
    %v873 = vld [vmem:[%s871 + $0x4] sm:$0xf]
    %v874 = vld [vmem:[%s871 + $0x8] sm:$0xf]
    %v875 = vld [vmem:[%s871 + $0xc] sm:$0xf]
    %v876 = vld [vmem:[%s871 + $0x10] sm:$0xf]
    %v877 = vld [vmem:[%s871 + $0x14] sm:$0xf]
    %v878 = vld [vmem:[%s871 + $0x18] sm:$0xf]
    %v879 = vld [vmem:[%s871 + $0x1c] sm:$0xf]
    %v880 = vld [vmem:[%s871 + $0x20] sm:$0xf]
    %v881 = vld [vmem:[%s871 + $0x24] sm:$0xf]
    %v882 = vld [vmem:[%s871 + $0x28] sm:$0xf]
    %v883 = vld [vmem:[%s871 + $0x2c] sm:$0xf]
    %v884 = vld [vmem:[%s871 + $0x30] sm:$0xf]
    %v885 = vld [vmem:[%s871 + $0x34] sm:$0xf]
    %v886 = vld [vmem:[%s871 + $0x38] sm:$0xf]
    %v887 = vld [vmem:[%s871 + $0x3c] sm:$0xf]
    %v904 = vunpack.c.l.b16 %v872
    %v905 = vunpack.c.l.b16 %v873
    %v906 = vunpack.c.l.b16 %v874
    %v907 = vunpack.c.l.b16 %v875
    %v908 = vunpack.c.l.b16 %v876
    %v909 = vunpack.c.l.b16 %v877
    %v910 = vunpack.c.l.b16 %v878
    %v911 = vunpack.c.l.b16 %v879
    %v912 = vunpack.c.l.b16 %v880
    %v913 = vunpack.c.l.b16 %v881
    %v914 = vunpack.c.l.b16 %v882
    %v915 = vunpack.c.l.b16 %v883
    %v916 = vunpack.c.l.b16 %v884
    %v917 = vunpack.c.l.b16 %v885
    %v918 = vunpack.c.l.b16 %v886
    %v919 = vunpack.c.l.b16 %v887
    %v920 = vpack.c.b16 %v905, %v904
    %v921 = vpack.c.b16 %v907, %v906
    %v922 = vpack.c.b16 %v909, %v908
    %v923 = vpack.c.b16 %v911, %v910
    %v924 = vpack.c.b16 %v913, %v912
    %v925 = vpack.c.b16 %v915, %v914
    %v926 = vpack.c.b16 %v917, %v916
    %v927 = vpack.c.b16 %v919, %v918
    %936 = vmatprep.subr.bf16.mxu0 0
    %937 = vmatpush1.bf16.msra.mxu0 %v920
    %938 = vmatprep.subr.bf16.mxu0 0
    %939 = vmatpush1.bf16.msra.mxu0 %v921
    %940 = vmatprep.subr.bf16.mxu0 0
    %941 = vmatpush1.bf16.msra.mxu0 %v922
    %942 = vmatprep.subr.bf16.mxu0 0
    %943 = vmatpush1.bf16.msra.mxu0 %v923
    %944 = vmatprep.subr.bf16.mxu0 0
    %945 = vmatpush1.bf16.msra.mxu0 %v924
    %946 = vmatprep.subr.bf16.mxu0 0
    %947 = vmatpush1.bf16.msra.mxu0 %v925
    %948 = vmatprep.subr.bf16.mxu0 0
    %949 = vmatpush1.bf16.msra.mxu0 %v926
    %950 = vmatprep.subr.bf16.mxu0 0
    %951 = vmatpush1.bf16.msra.mxu0 %v927
    %952 = vmatprep.subr.bf16.mxu0 0
    %953 = vmatpush1.bf16.msra.mxu0 0
    %954 = vmatprep.subr.bf16.mxu0 0
    %955 = vmatpush1.bf16.msra.mxu0 0
    %956 = vmatprep.subr.bf16.mxu0 0
    %957 = vmatpush1.bf16.msra.mxu0 0
    %958 = vmatprep.subr.bf16.mxu0 0
    %959 = vmatpush1.bf16.msra.mxu0 0
    %960 = vmatprep.subr.bf16.mxu0 0
    %961 = vmatpush1.bf16.msra.mxu0 0
    %962 = vmatprep.subr.bf16.mxu0 0
    %963 = vmatpush1.bf16.msra.mxu0 0
    %964 = vmatprep.subr.bf16.mxu0 0
    %965 = vmatpush1.bf16.msra.mxu0 0
    %966 = vmatprep.subr.bf16.mxu0 0
    %967 = vmatpush1.bf16.msra.mxu0 0
    %968 = vmatprep.mubr.bf16.mxu0 0
    %969 = vmatmul.mubr.bf16.gmra.mrb[0].mxu0 %v747
    %v970 = vpop.f32.mrb[0].mxu0
    %v971 = vadd.f32 0.0, %v970
    %v972 = vpop.f32.mrb[0].mxu0
    %v973 = vpop.f32.mrb[0].mxu0
    %v974 = vadd.f32 0.0, %v973
    %v975 = vpop.f32.mrb[0].mxu0
    %976 = vmatprep.mubr.bf16.mxu0 0
    %977 = vmatmul.mubr.bf16.gmra.mrb[0].mxu0 %v748
    %v978 = vpop.f32.mrb[0].mxu0
    %v979 = vadd.f32 0.0, %v978
    %v980 = vpop.f32.mrb[0].mxu0
    %v981 = vpop.f32.mrb[0].mxu0
    %v982 = vadd.f32 0.0, %v981
    %v983 = vpop.f32.mrb[0].mxu0
    %984 = vdwg.mxu0
    %v985 = vrot.slane %v971, 6
    %v986 = vrot.slane %v979, 6
    %v987 = vrot.slane %v974, 6
    %v988 = vrot.slane %v982, 6
    %vm989 = vcmp.lt.s32.totalorder %v84, 2
    %v990 = vsel %vm989, %v985, %v987
    %v991 = vsel %vm989, %v986, %v988
    %v992 = vsel %vm989, %v987, %v985
    %v993 = vsel %vm989, %v988, %v986
    %vm994 = vcmp.ge.s32.totalorder %v84, 2
    %vm995 = vcmp.ge.s32.totalorder %v85, 2
    %v996 = vsel %vm994, 1, 0
    %v997 = vsel %vm995, 1, 0
    %vm998 = vcmp.eq.s32.totalorder %v996, 1
    %vm999 = vcmp.eq.s32.totalorder %v997, 1
    %v1000 = vsel %vm998, %v992, 0.0
    %v1001 = vsel %vm999, %v990, 0.0
    %v1002 = vsel %vm998, %v993, 0.0
    %v1003 = vsel %vm999, %v991, 0.0
    %v1004 = vadd.f32 %v857, %v1000
    %v1005 = vadd.f32 %v860, %v1001
    %v1006 = vadd.f32 %v865, %v1002
    %v1007 = vadd.f32 %v868, %v1003
    %v1008 = vmax.f32 %v1004, 0.0
    %v1009 = vmax.f32 %v1005, 0.0
    %v1010 = vmax.f32 %v1006, 0.0
    %v1011 = vmax.f32 %v1007, 0.0
    %v1012 = vpack.c.bf16 %v1009, %v1008
    %v1013 = vpack.c.bf16 %v1011, %v1010
    %s1014 = scalar_lea.vmem %s4, 1
    %v1015 = vld [vmem:[%s1014] sm:$0x1]
    %s1016 = scalar_lea.vmem [#allocation7], 192
    %v1017 = vld [vmem:[%s1016] sm:$0xf]
    %v1018 = vld [vmem:[%s1016 + $0x4] sm:$0xf]
    %v1019 = vld [vmem:[%s1016 + $0x8] sm:$0xf]
    %v1020 = vld [vmem:[%s1016 + $0xc] sm:$0xf]
    %v1021 = vld [vmem:[%s1016 + $0x10] sm:$0xf]
    %v1022 = vld [vmem:[%s1016 + $0x14] sm:$0xf]
    %v1023 = vld [vmem:[%s1016 + $0x18] sm:$0xf]
    %v1024 = vld [vmem:[%s1016 + $0x1c] sm:$0xf]
    %v1025 = vld [vmem:[%s1016 + $0x20] sm:$0xf]
    %v1026 = vld [vmem:[%s1016 + $0x24] sm:$0xf]
    %v1027 = vld [vmem:[%s1016 + $0x28] sm:$0xf]
    %v1028 = vld [vmem:[%s1016 + $0x2c] sm:$0xf]
    %v1029 = vld [vmem:[%s1016 + $0x30] sm:$0xf]
    %v1030 = vld [vmem:[%s1016 + $0x34] sm:$0xf]
    %v1031 = vld [vmem:[%s1016 + $0x38] sm:$0xf]
    %v1032 = vld [vmem:[%s1016 + $0x3c] sm:$0xf]
    %v1034 = vlaneseq
    %v1035 = vshrl.u32 %v1034, 7
    %v1036 = vsub.s32 0, %v1035
    %v1037 = vrot.slane %v1015, %v1036
    %v1055 = vunpack.c.l.b16 %v1017
    %v1056 = vunpack.c.l.b16 %v1018
    %v1057 = vunpack.c.l.b16 %v1019
    %v1058 = vunpack.c.l.b16 %v1020
    %v1059 = vunpack.c.l.b16 %v1021
    %v1060 = vunpack.c.l.b16 %v1022
    %v1061 = vunpack.c.l.b16 %v1023
    %v1062 = vunpack.c.l.b16 %v1024
    %v1063 = vunpack.c.l.b16 %v1025
    %v1064 = vunpack.c.l.b16 %v1026
    %v1065 = vunpack.c.l.b16 %v1027
    %v1066 = vunpack.c.l.b16 %v1028
    %v1067 = vunpack.c.l.b16 %v1029
    %v1068 = vunpack.c.l.b16 %v1030
    %v1069 = vunpack.c.l.b16 %v1031
    %v1070 = vunpack.c.l.b16 %v1032
    %v1071 = vpack.c.b16 %v1056, %v1055
    %v1072 = vpack.c.b16 %v1058, %v1057
    %v1073 = vpack.c.b16 %v1060, %v1059
    %v1074 = vpack.c.b16 %v1062, %v1061
    %v1075 = vpack.c.b16 %v1064, %v1063
    %v1076 = vpack.c.b16 %v1066, %v1065
    %v1077 = vpack.c.b16 %v1068, %v1067
    %v1078 = vpack.c.b16 %v1070, %v1069
    %1087 = vmatprep.subr.bf16.mxu0 0
    %1088 = vmatpush1.bf16.msra.mxu0 %v1071
    %1089 = vmatprep.subr.bf16.mxu0 0
    %1090 = vmatpush1.bf16.msra.mxu0 %v1072
    %1091 = vmatprep.subr.bf16.mxu0 0
    %1092 = vmatpush1.bf16.msra.mxu0 %v1073
    %1093 = vmatprep.subr.bf16.mxu0 0
    %1094 = vmatpush1.bf16.msra.mxu0 %v1074
    %1095 = vmatprep.subr.bf16.mxu0 0
    %1096 = vmatpush1.bf16.msra.mxu0 %v1075
    %1097 = vmatprep.subr.bf16.mxu0 0
    %1098 = vmatpush1.bf16.msra.mxu0 %v1076
    %1099 = vmatprep.subr.bf16.mxu0 0
    %1100 = vmatpush1.bf16.msra.mxu0 %v1077
    %1101 = vmatprep.subr.bf16.mxu0 0
    %1102 = vmatpush1.bf16.msra.mxu0 %v1078
    %1103 = vmatprep.subr.bf16.mxu0 0
    %1104 = vmatpush1.bf16.msra.mxu0 0
    %1105 = vmatprep.subr.bf16.mxu0 0
    %1106 = vmatpush1.bf16.msra.mxu0 0
    %1107 = vmatprep.subr.bf16.mxu0 0
    %1108 = vmatpush1.bf16.msra.mxu0 0
    %1109 = vmatprep.subr.bf16.mxu0 0
    %1110 = vmatpush1.bf16.msra.mxu0 0
    %1111 = vmatprep.subr.bf16.mxu0 0
    %1112 = vmatpush1.bf16.msra.mxu0 0
    %1113 = vmatprep.subr.bf16.mxu0 0
    %1114 = vmatpush1.bf16.msra.mxu0 0
    %1115 = vmatprep.subr.bf16.mxu0 0
    %1116 = vmatpush1.bf16.msra.mxu0 0
    %1117 = vmatprep.subr.bf16.mxu0 0
    %1118 = vmatpush1.bf16.msra.mxu0 0
    %1119 = vmatprep.mubr.bf16.mxu0 0
    %1120 = vmatmul.mubr.bf16.gmra.mrb[0].mxu0 %v1012
    %v1121 = vpop.f32.mrb[0].mxu0
    %v1122 = vadd.f32 %v1037, %v1121
    %v1123 = vpop.f32.mrb[0].mxu0
    %v1124 = vpop.f32.mrb[0].mxu0
    %v1125 = vadd.f32 %v1037, %v1124
    %v1126 = vpop.f32.mrb[0].mxu0
    %1127 = vmatprep.mubr.bf16.mxu0 0
    %1128 = vmatmul.mubr.bf16.gmra.mrb[0].mxu0 %v1013
    %v1129 = vpop.f32.mrb[0].mxu0
    %v1130 = vadd.f32 %v1037, %v1129
    %v1131 = vpop.f32.mrb[0].mxu0
    %v1132 = vpop.f32.mrb[0].mxu0
    %v1133 = vadd.f32 %v1037, %v1132
    %v1134 = vpop.f32.mrb[0].mxu0
    %1135 = vdwg.mxu0
    %s1136 = scalar_lea.vmem [#allocation7], 128
    %v1137 = vld [vmem:[%s1136] sm:$0xf]
    %v1138 = vld [vmem:[%s1136 + $0x4] sm:$0xf]
    %v1139 = vld [vmem:[%s1136 + $0x8] sm:$0xf]
    %v1140 = vld [vmem:[%s1136 + $0xc] sm:$0xf]
    %v1141 = vld [vmem:[%s1136 + $0x10] sm:$0xf]
    %v1142 = vld [vmem:[%s1136 + $0x14] sm:$0xf]
    %v1143 = vld [vmem:[%s1136 + $0x18] sm:$0xf]
    %v1144 = vld [vmem:[%s1136 + $0x1c] sm:$0xf]
    %v1145 = vld [vmem:[%s1136 + $0x20] sm:$0xf]
    %v1146 = vld [vmem:[%s1136 + $0x24] sm:$0xf]
    %v1147 = vld [vmem:[%s1136 + $0x28] sm:$0xf]
    %v1148 = vld [vmem:[%s1136 + $0x2c] sm:$0xf]
    %v1149 = vld [vmem:[%s1136 + $0x30] sm:$0xf]
    %v1150 = vld [vmem:[%s1136 + $0x34] sm:$0xf]
    %v1151 = vld [vmem:[%s1136 + $0x38] sm:$0xf]
    %v1152 = vld [vmem:[%s1136 + $0x3c] sm:$0xf]
    %v1169 = vunpack.c.l.b16 %v1137
    %v1170 = vunpack.c.l.b16 %v1138
    %v1171 = vunpack.c.l.b16 %v1139
    %v1172 = vunpack.c.l.b16 %v1140
    %v1173 = vunpack.c.l.b16 %v1141
    %v1174 = vunpack.c.l.b16 %v1142
    %v1175 = vunpack.c.l.b16 %v1143
    %v1176 = vunpack.c.l.b16 %v1144
    %v1177 = vunpack.c.l.b16 %v1145
    %v1178 = vunpack.c.l.b16 %v1146
    %v1179 = vunpack.c.l.b16 %v1147
    %v1180 = vunpack.c.l.b16 %v1148
    %v1181 = vunpack.c.l.b16 %v1149
    %v1182 = vunpack.c.l.b16 %v1150
    %v1183 = vunpack.c.l.b16 %v1151
    %v1184 = vunpack.c.l.b16 %v1152
    %v1185 = vpack.c.b16 %v1170, %v1169
    %v1186 = vpack.c.b16 %v1172, %v1171
    %v1187 = vpack.c.b16 %v1174, %v1173
    %v1188 = vpack.c.b16 %v1176, %v1175
    %v1189 = vpack.c.b16 %v1178, %v1177
    %v1190 = vpack.c.b16 %v1180, %v1179
    %v1191 = vpack.c.b16 %v1182, %v1181
    %v1192 = vpack.c.b16 %v1184, %v1183
    %1201 = vmatprep.subr.bf16.mxu0 0
    %1202 = vmatpush1.bf16.msra.mxu0 %v1185
    %1203 = vmatprep.subr.bf16.mxu0 0
    %1204 = vmatpush1.bf16.msra.mxu0 %v1186
    %1205 = vmatprep.subr.bf16.mxu0 0
    %1206 = vmatpush1.bf16.msra.mxu0 %v1187
    %1207 = vmatprep.subr.bf16.mxu0 0
    %1208 = vmatpush1.bf16.msra.mxu0 %v1188
    %1209 = vmatprep.subr.bf16.mxu0 0
    %1210 = vmatpush1.bf16.msra.mxu0 %v1189
    %1211 = vmatprep.subr.bf16.mxu0 0
    %1212 = vmatpush1.bf16.msra.mxu0 %v1190
    %1213 = vmatprep.subr.bf16.mxu0 0
    %1214 = vmatpush1.bf16.msra.mxu0 %v1191
    %1215 = vmatprep.subr.bf16.mxu0 0
    %1216 = vmatpush1.bf16.msra.mxu0 %v1192
    %1217 = vmatprep.subr.bf16.mxu0 0
    %1218 = vmatpush1.bf16.msra.mxu0 0
    %1219 = vmatprep.subr.bf16.mxu0 0
    %1220 = vmatpush1.bf16.msra.mxu0 0
    %1221 = vmatprep.subr.bf16.mxu0 0
    %1222 = vmatpush1.bf16.msra.mxu0 0
    %1223 = vmatprep.subr.bf16.mxu0 0
    %1224 = vmatpush1.bf16.msra.mxu0 0
    %1225 = vmatprep.subr.bf16.mxu0 0
    %1226 = vmatpush1.bf16.msra.mxu0 0
    %1227 = vmatprep.subr.bf16.mxu0 0
    %1228 = vmatpush1.bf16.msra.mxu0 0
    %1229 = vmatprep.subr.bf16.mxu0 0
    %1230 = vmatpush1.bf16.msra.mxu0 0
    %1231 = vmatprep.subr.bf16.mxu0 0
    %1232 = vmatpush1.bf16.msra.mxu0 0
    %1233 = vmatprep.mubr.bf16.mxu0 0
    %1234 = vmatmul.mubr.bf16.gmra.mrb[0].mxu0 %v1012
    %v1235 = vpop.f32.mrb[0].mxu0
    %v1236 = vadd.f32 0.0, %v1235
    %v1237 = vpop.f32.mrb[0].mxu0
    %v1238 = vpop.f32.mrb[0].mxu0
    %v1239 = vadd.f32 0.0, %v1238
    %v1240 = vpop.f32.mrb[0].mxu0
    %1241 = vmatprep.mubr.bf16.mxu0 0
    %1242 = vmatmul.mubr.bf16.gmra.mrb[0].mxu0 %v1013
    %v1243 = vpop.f32.mrb[0].mxu0
    %v1244 = vadd.f32 0.0, %v1243
    %v1245 = vpop.f32.mrb[0].mxu0
    %v1246 = vpop.f32.mrb[0].mxu0
    %v1247 = vadd.f32 0.0, %v1246
    %v1248 = vpop.f32.mrb[0].mxu0
    %1249 = vdwg.mxu0
    %v1250 = vrot.slane %v1236, 6
    %v1251 = vrot.slane %v1244, 6
    %v1252 = vrot.slane %v1239, 6
    %v1253 = vrot.slane %v1247, 6
    %v1254 = vsel %vm989, %v1250, %v1252
    %v1255 = vsel %vm989, %v1251, %v1253
    %v1256 = vsel %vm989, %v1252, %v1250
    %v1257 = vsel %vm989, %v1253, %v1251
    %v1258 = vsel %vm998, %v1256, 0.0
    %v1259 = vsel %vm999, %v1254, 0.0
    %v1260 = vsel %vm998, %v1257, 0.0
    %v1261 = vsel %vm999, %v1255, 0.0
    %v1262 = vadd.f32 %v1122, %v1258
    %v1263 = vadd.f32 %v1125, %v1259
    %v1264 = vadd.f32 %v1130, %v1260
    %v1265 = vadd.f32 %v1133, %v1261
    %v1266 = vmax.f32 %v1262, 0.0
    %v1267 = vmax.f32 %v1263, 0.0
    %v1268 = vmax.f32 %v1264, 0.0
    %v1269 = vmax.f32 %v1265, 0.0
    %v1270 = vunpack.c.l.bf16 %v747
    %v1271 = vunpack.c.h.bf16 %v747
    %v1272 = vunpack.c.l.bf16 %v748
    %v1273 = vunpack.c.h.bf16 %v748
    %v1274 = vadd.f32 %v1266, %v1270
    %v1275 = vadd.f32 %v1267, %v1271
    %v1276 = vadd.f32 %v1268, %v1272
    %v1277 = vadd.f32 %v1269, %v1273
    %v1278 = vmax.f32 %v1274, 0.0
    %v1279 = vmax.f32 %v1275, 0.0
    %v1280 = vmax.f32 %v1276, 0.0
    %v1281 = vmax.f32 %v1277, 0.0
    %v1282 = vpack.c.bf16 %v1279, %v1278
    %v1283 = vpack.c.bf16 %v1281, %v1280
    %s1284 = scalar_lea.vmem %s2, 2
    %v1285 = vld [vmem:[%s1284] sm:$0x1]
    %s1286 = scalar_lea.vmem [#allocation5], 320
    %v1287 = vld [vmem:[%s1286] sm:$0xf]
    %v1288 = vld [vmem:[%s1286 + $0x4] sm:$0xf]
    %v1289 = vld [vmem:[%s1286 + $0x8] sm:$0xf]
    %v1290 = vld [vmem:[%s1286 + $0xc] sm:$0xf]
    %v1291 = vld [vmem:[%s1286 + $0x10] sm:$0xf]
    %v1292 = vld [vmem:[%s1286 + $0x14] sm:$0xf]
    %v1293 = vld [vmem:[%s1286 + $0x18] sm:$0xf]
    %v1294 = vld [vmem:[%s1286 + $0x1c] sm:$0xf]
    %v1295 = vld [vmem:[%s1286 + $0x20] sm:$0xf]
    %v1296 = vld [vmem:[%s1286 + $0x24] sm:$0xf]
    %v1297 = vld [vmem:[%s1286 + $0x28] sm:$0xf]
    %v1298 = vld [vmem:[%s1286 + $0x2c] sm:$0xf]
    %v1299 = vld [vmem:[%s1286 + $0x30] sm:$0xf]
    %v1300 = vld [vmem:[%s1286 + $0x34] sm:$0xf]
    %v1301 = vld [vmem:[%s1286 + $0x38] sm:$0xf]
    %v1302 = vld [vmem:[%s1286 + $0x3c] sm:$0xf]
    %v1304 = vlaneseq
    %v1305 = vshrl.u32 %v1304, 7
    %v1306 = vsub.s32 0, %v1305
    %v1307 = vrot.slane %v1285, %v1306
    %v1325 = vunpack.c.l.b16 %v1287
    %v1326 = vunpack.c.l.b16 %v1288
    %v1327 = vunpack.c.l.b16 %v1289
    %v1328 = vunpack.c.l.b16 %v1290
    %v1329 = vunpack.c.l.b16 %v1291
    %v1330 = vunpack.c.l.b16 %v1292
    %v1331 = vunpack.c.l.b16 %v1293
    %v1332 = vunpack.c.l.b16 %v1294
    %v1333 = vunpack.c.l.b16 %v1295
    %v1334 = vunpack.c.l.b16 %v1296
    %v1335 = vunpack.c.l.b16 %v1297
    %v1336 = vunpack.c.l.b16 %v1298
    %v1337 = vunpack.c.l.b16 %v1299
    %v1338 = vunpack.c.l.b16 %v1300
    %v1339 = vunpack.c.l.b16 %v1301
    %v1340 = vunpack.c.l.b16 %v1302
    %v1341 = vpack.c.b16 %v1326, %v1325
    %v1342 = vpack.c.b16 %v1328, %v1327
    %v1343 = vpack.c.b16 %v1330, %v1329
    %v1344 = vpack.c.b16 %v1332, %v1331
    %v1345 = vpack.c.b16 %v1334, %v1333
    %v1346 = vpack.c.b16 %v1336, %v1335
    %v1347 = vpack.c.b16 %v1338, %v1337
    %v1348 = vpack.c.b16 %v1340, %v1339
    %1357 = vmatprep.subr.bf16.mxu0 0
    %1358 = vmatpush1.bf16.msra.mxu0 %v1341
    %1359 = vmatprep.subr.bf16.mxu0 0
    %1360 = vmatpush1.bf16.msra.mxu0 %v1342
    %1361 = vmatprep.subr.bf16.mxu0 0
    %1362 = vmatpush1.bf16.msra.mxu0 %v1343
    %1363 = vmatprep.subr.bf16.mxu0 0
    %1364 = vmatpush1.bf16.msra.mxu0 %v1344
    %1365 = vmatprep.subr.bf16.mxu0 0
    %1366 = vmatpush1.bf16.msra.mxu0 %v1345
    %1367 = vmatprep.subr.bf16.mxu0 0
    %1368 = vmatpush1.bf16.msra.mxu0 %v1346
    %1369 = vmatprep.subr.bf16.mxu0 0
    %1370 = vmatpush1.bf16.msra.mxu0 %v1347
    %1371 = vmatprep.subr.bf16.mxu0 0
    %1372 = vmatpush1.bf16.msra.mxu0 %v1348
    %1373 = vmatprep.subr.bf16.mxu0 0
    %1374 = vmatpush1.bf16.msra.mxu0 0
    %1375 = vmatprep.subr.bf16.mxu0 0
    %1376 = vmatpush1.bf16.msra.mxu0 0
    %1377 = vmatprep.subr.bf16.mxu0 0
    %1378 = vmatpush1.bf16.msra.mxu0 0
    %1379 = vmatprep.subr.bf16.mxu0 0
    %1380 = vmatpush1.bf16.msra.mxu0 0
    %1381 = vmatprep.subr.bf16.mxu0 0
    %1382 = vmatpush1.bf16.msra.mxu0 0
    %1383 = vmatprep.subr.bf16.mxu0 0
    %1384 = vmatpush1.bf16.msra.mxu0 0
    %1385 = vmatprep.subr.bf16.mxu0 0
    %1386 = vmatpush1.bf16.msra.mxu0 0
    %1387 = vmatprep.subr.bf16.mxu0 0
    %1388 = vmatpush1.bf16.msra.mxu0 0
    %1389 = vmatprep.mubr.bf16.mxu0 0
    %1390 = vmatmul.mubr.bf16.gmra.mrb[0].mxu0 %v1282
    %v1391 = vpop.f32.mrb[0].mxu0
    %v1392 = vadd.f32 %v1307, %v1391
    %v1393 = vpop.f32.mrb[0].mxu0
    %v1394 = vpop.f32.mrb[0].mxu0
    %v1395 = vadd.f32 %v1307, %v1394
    %v1396 = vpop.f32.mrb[0].mxu0
    %1397 = vmatprep.mubr.bf16.mxu0 0
    %1398 = vmatmul.mubr.bf16.gmra.mrb[0].mxu0 %v1283
    %v1399 = vpop.f32.mrb[0].mxu0
    %v1400 = vadd.f32 %v1307, %v1399
    %v1401 = vpop.f32.mrb[0].mxu0
    %v1402 = vpop.f32.mrb[0].mxu0
    %v1403 = vadd.f32 %v1307, %v1402
    %v1404 = vpop.f32.mrb[0].mxu0
    %1405 = vdwg.mxu0
    %s1406 = scalar_lea.vmem [#allocation5], 256
    %v1407 = vld [vmem:[%s1406] sm:$0xf]
    %v1408 = vld [vmem:[%s1406 + $0x4] sm:$0xf]
    %v1409 = vld [vmem:[%s1406 + $0x8] sm:$0xf]
    %v1410 = vld [vmem:[%s1406 + $0xc] sm:$0xf]
    %v1411 = vld [vmem:[%s1406 + $0x10] sm:$0xf]
    %v1412 = vld [vmem:[%s1406 + $0x14] sm:$0xf]
    %v1413 = vld [vmem:[%s1406 + $0x18] sm:$0xf]
    %v1414 = vld [vmem:[%s1406 + $0x1c] sm:$0xf]
    %v1415 = vld [vmem:[%s1406 + $0x20] sm:$0xf]
    %v1416 = vld [vmem:[%s1406 + $0x24] sm:$0xf]
    %v1417 = vld [vmem:[%s1406 + $0x28] sm:$0xf]
    %v1418 = vld [vmem:[%s1406 + $0x2c] sm:$0xf]
    %v1419 = vld [vmem:[%s1406 + $0x30] sm:$0xf]
    %v1420 = vld [vmem:[%s1406 + $0x34] sm:$0xf]
    %v1421 = vld [vmem:[%s1406 + $0x38] sm:$0xf]
    %v1422 = vld [vmem:[%s1406 + $0x3c] sm:$0xf]
    %v1439 = vunpack.c.l.b16 %v1407
    %v1440 = vunpack.c.l.b16 %v1408
    %v1441 = vunpack.c.l.b16 %v1409
    %v1442 = vunpack.c.l.b16 %v1410
    %v1443 = vunpack.c.l.b16 %v1411
    %v1444 = vunpack.c.l.b16 %v1412
    %v1445 = vunpack.c.l.b16 %v1413
    %v1446 = vunpack.c.l.b16 %v1414
    %v1447 = vunpack.c.l.b16 %v1415
    %v1448 = vunpack.c.l.b16 %v1416
    %v1449 = vunpack.c.l.b16 %v1417
    %v1450 = vunpack.c.l.b16 %v1418
    %v1451 = vunpack.c.l.b16 %v1419
    %v1452 = vunpack.c.l.b16 %v1420
    %v1453 = vunpack.c.l.b16 %v1421
    %v1454 = vunpack.c.l.b16 %v1422
    %v1455 = vpack.c.b16 %v1440, %v1439
    %v1456 = vpack.c.b16 %v1442, %v1441
    %v1457 = vpack.c.b16 %v1444, %v1443
    %v1458 = vpack.c.b16 %v1446, %v1445
    %v1459 = vpack.c.b16 %v1448, %v1447
    %v1460 = vpack.c.b16 %v1450, %v1449
    %v1461 = vpack.c.b16 %v1452, %v1451
    %v1462 = vpack.c.b16 %v1454, %v1453
    %1471 = vmatprep.subr.bf16.mxu0 0
    %1472 = vmatpush1.bf16.msra.mxu0 %v1455
    %1473 = vmatprep.subr.bf16.mxu0 0
    %1474 = vmatpush1.bf16.msra.mxu0 %v1456
    %1475 = vmatprep.subr.bf16.mxu0 0
    %1476 = vmatpush1.bf16.msra.mxu0 %v1457
    %1477 = vmatprep.subr.bf16.mxu0 0
    %1478 = vmatpush1.bf16.msra.mxu0 %v1458
    %1479 = vmatprep.subr.bf16.mxu0 0
    %1480 = vmatpush1.bf16.msra.mxu0 %v1459
    %1481 = vmatprep.subr.bf16.mxu0 0
    %1482 = vmatpush1.bf16.msra.mxu0 %v1460
    %1483 = vmatprep.subr.bf16.mxu0 0
    %1484 = vmatpush1.bf16.msra.mxu0 %v1461
    %1485 = vmatprep.subr.bf16.mxu0 0
    %1486 = vmatpush1.bf16.msra.mxu0 %v1462
    %1487 = vmatprep.subr.bf16.mxu0 0
    %1488 = vmatpush1.bf16.msra.mxu0 0
    %1489 = vmatprep.subr.bf16.mxu0 0
    %1490 = vmatpush1.bf16.msra.mxu0 0
    %1491 = vmatprep.subr.bf16.mxu0 0
    %1492 = vmatpush1.bf16.msra.mxu0 0
    %1493 = vmatprep.subr.bf16.mxu0 0
    %1494 = vmatpush1.bf16.msra.mxu0 0
    %1495 = vmatprep.subr.bf16.mxu0 0
    %1496 = vmatpush1.bf16.msra.mxu0 0
    %1497 = vmatprep.subr.bf16.mxu0 0
    %1498 = vmatpush1.bf16.msra.mxu0 0
    %1499 = vmatprep.subr.bf16.mxu0 0
    %1500 = vmatpush1.bf16.msra.mxu0 0
    %1501 = vmatprep.subr.bf16.mxu0 0
    %1502 = vmatpush1.bf16.msra.mxu0 0
    %1503 = vmatprep.mubr.bf16.mxu0 0
    %1504 = vmatmul.mubr.bf16.gmra.mrb[0].mxu0 %v1282
    %v1505 = vpop.f32.mrb[0].mxu0
    %v1506 = vadd.f32 0.0, %v1505
    %v1507 = vpop.f32.mrb[0].mxu0
    %v1508 = vpop.f32.mrb[0].mxu0
    %v1509 = vadd.f32 0.0, %v1508
    %v1510 = vpop.f32.mrb[0].mxu0
    %1511 = vmatprep.mubr.bf16.mxu0 0
    %1512 = vmatmul.mubr.bf16.gmra.mrb[0].mxu0 %v1283
    %v1513 = vpop.f32.mrb[0].mxu0
    %v1514 = vadd.f32 0.0, %v1513
    %v1515 = vpop.f32.mrb[0].mxu0
    %v1516 = vpop.f32.mrb[0].mxu0
    %v1517 = vadd.f32 0.0, %v1516
    %v1518 = vpop.f32.mrb[0].mxu0
    %1519 = vdwg.mxu0
    %v1520 = vrot.slane %v1506, 4
    %v1521 = vrot.slane %v1514, 4
    %v1522 = vrot.slane %v1509, 4
    %v1523 = vrot.slane %v1517, 4
    %vm1524 = vcmp.lt.s32.totalorder %v84, 4
    %v1525 = vsel %vm1524, %v1520, %v1522
    %v1526 = vsel %vm1524, %v1521, %v1523
    %v1527 = vsel %vm1524, %v1522, %v1520
    %v1528 = vsel %vm1524, %v1523, %v1521
    %vm1529 = vcmp.ge.s32.totalorder %v84, 4
    %vm1530 = vcmp.ge.s32.totalorder %v85, 4
    %v1531 = vsel %vm1529, 1, 0
    %v1532 = vsel %vm1530, 1, 0
    %vm1533 = vcmp.eq.s32.totalorder %v1531, 1
    %vm1534 = vcmp.eq.s32.totalorder %v1532, 1
    %v1535 = vsel %vm1533, %v1527, 0.0
    %v1536 = vsel %vm1534, %v1525, 0.0
    %v1537 = vsel %vm1533, %v1528, 0.0
    %v1538 = vsel %vm1534, %v1526, 0.0
    %v1539 = vadd.f32 %v1392, %v1535
    %v1540 = vadd.f32 %v1395, %v1536
    %v1541 = vadd.f32 %v1400, %v1537
    %v1542 = vadd.f32 %v1403, %v1538
    %v1543 = vmax.f32 %v1539, 0.0
    %v1544 = vmax.f32 %v1540, 0.0
    %v1545 = vmax.f32 %v1541, 0.0
    %v1546 = vmax.f32 %v1542, 0.0
    %v1547 = vpack.c.bf16 %v1544, %v1543
    %v1548 = vpack.c.bf16 %v1546, %v1545
    %s1549 = scalar_lea.vmem %s4, 2
    %v1550 = vld [vmem:[%s1549] sm:$0x1]
    %s1551 = scalar_lea.vmem [#allocation7], 320
    %v1552 = vld [vmem:[%s1551] sm:$0xf]
    %v1553 = vld [vmem:[%s1551 + $0x4] sm:$0xf]
    %v1554 = vld [vmem:[%s1551 + $0x8] sm:$0xf]
    %v1555 = vld [vmem:[%s1551 + $0xc] sm:$0xf]
    %v1556 = vld [vmem:[%s1551 + $0x10] sm:$0xf]
    %v1557 = vld [vmem:[%s1551 + $0x14] sm:$0xf]
    %v1558 = vld [vmem:[%s1551 + $0x18] sm:$0xf]
    %v1559 = vld [vmem:[%s1551 + $0x1c] sm:$0xf]
    %v1560 = vld [vmem:[%s1551 + $0x20] sm:$0xf]
    %v1561 = vld [vmem:[%s1551 + $0x24] sm:$0xf]
    %v1562 = vld [vmem:[%s1551 + $0x28] sm:$0xf]
    %v1563 = vld [vmem:[%s1551 + $0x2c] sm:$0xf]
    %v1564 = vld [vmem:[%s1551 + $0x30] sm:$0xf]
    %v1565 = vld [vmem:[%s1551 + $0x34] sm:$0xf]
    %v1566 = vld [vmem:[%s1551 + $0x38] sm:$0xf]
    %v1567 = vld [vmem:[%s1551 + $0x3c] sm:$0xf]
    %v1569 = vlaneseq
    %v1570 = vshrl.u32 %v1569, 7
    %v1571 = vsub.s32 0, %v1570
    %v1572 = vrot.slane %v1550, %v1571
    %v1590 = vunpack.c.l.b16 %v1552
    %v1591 = vunpack.c.l.b16 %v1553
    %v1592 = vunpack.c.l.b16 %v1554
    %v1593 = vunpack.c.l.b16 %v1555
    %v1594 = vunpack.c.l.b16 %v1556
    %v1595 = vunpack.c.l.b16 %v1557
    %v1596 = vunpack.c.l.b16 %v1558
    %v1597 = vunpack.c.l.b16 %v1559
    %v1598 = vunpack.c.l.b16 %v1560
    %v1599 = vunpack.c.l.b16 %v1561
    %v1600 = vunpack.c.l.b16 %v1562
    %v1601 = vunpack.c.l.b16 %v1563
    %v1602 = vunpack.c.l.b16 %v1564
    %v1603 = vunpack.c.l.b16 %v1565
    %v1604 = vunpack.c.l.b16 %v1566
    %v1605 = vunpack.c.l.b16 %v1567
    %v1606 = vpack.c.b16 %v1591, %v1590
    %v1607 = vpack.c.b16 %v1593, %v1592
    %v1608 = vpack.c.b16 %v1595, %v1594
    %v1609 = vpack.c.b16 %v1597, %v1596
    %v1610 = vpack.c.b16 %v1599, %v1598
    %v1611 = vpack.c.b16 %v1601, %v1600
    %v1612 = vpack.c.b16 %v1603, %v1602
    %v1613 = vpack.c.b16 %v1605, %v1604
    %1622 = vmatprep.subr.bf16.mxu0 0
    %1623 = vmatpush1.bf16.msra.mxu0 %v1606
    %1624 = vmatprep.subr.bf16.mxu0 0
    %1625 = vmatpush1.bf16.msra.mxu0 %v1607
    %1626 = vmatprep.subr.bf16.mxu0 0
    %1627 = vmatpush1.bf16.msra.mxu0 %v1608
    %1628 = vmatprep.subr.bf16.mxu0 0
    %1629 = vmatpush1.bf16.msra.mxu0 %v1609
    %1630 = vmatprep.subr.bf16.mxu0 0
    %1631 = vmatpush1.bf16.msra.mxu0 %v1610
    %1632 = vmatprep.subr.bf16.mxu0 0
    %1633 = vmatpush1.bf16.msra.mxu0 %v1611
    %1634 = vmatprep.subr.bf16.mxu0 0
    %1635 = vmatpush1.bf16.msra.mxu0 %v1612
    %1636 = vmatprep.subr.bf16.mxu0 0
    %1637 = vmatpush1.bf16.msra.mxu0 %v1613
    %1638 = vmatprep.subr.bf16.mxu0 0
    %1639 = vmatpush1.bf16.msra.mxu0 0
    %1640 = vmatprep.subr.bf16.mxu0 0
    %1641 = vmatpush1.bf16.msra.mxu0 0
    %1642 = vmatprep.subr.bf16.mxu0 0
    %1643 = vmatpush1.bf16.msra.mxu0 0
    %1644 = vmatprep.subr.bf16.mxu0 0
    %1645 = vmatpush1.bf16.msra.mxu0 0
    %1646 = vmatprep.subr.bf16.mxu0 0
    %1647 = vmatpush1.bf16.msra.mxu0 0
    %1648 = vmatprep.subr.bf16.mxu0 0
    %1649 = vmatpush1.bf16.msra.mxu0 0
    %1650 = vmatprep.subr.bf16.mxu0 0
    %1651 = vmatpush1.bf16.msra.mxu0 0
    %1652 = vmatprep.subr.bf16.mxu0 0
    %1653 = vmatpush1.bf16.msra.mxu0 0
    %1654 = vmatprep.mubr.bf16.mxu0 0
    %1655 = vmatmul.mubr.bf16.gmra.mrb[0].mxu0 %v1547
    %v1656 = vpop.f32.mrb[0].mxu0
    %v1657 = vadd.f32 %v1572, %v1656
    %v1658 = vpop.f32.mrb[0].mxu0
    %v1659 = vpop.f32.mrb[0].mxu0
    %v1660 = vadd.f32 %v1572, %v1659
    %v1661 = vpop.f32.mrb[0].mxu0
    %1662 = vmatprep.mubr.bf16.mxu0 0
    %1663 = vmatmul.mubr.bf16.gmra.mrb[0].mxu0 %v1548
    %v1664 = vpop.f32.mrb[0].mxu0
    %v1665 = vadd.f32 %v1572, %v1664
    %v1666 = vpop.f32.mrb[0].mxu0
    %v1667 = vpop.f32.mrb[0].mxu0
    %v1668 = vadd.f32 %v1572, %v1667
    %v1669 = vpop.f32.mrb[0].mxu0
    %1670 = vdwg.mxu0
    %s1671 = scalar_lea.vmem [#allocation7], 256
    %v1672 = vld [vmem:[%s1671] sm:$0xf]
    %v1673 = vld [vmem:[%s1671 + $0x4] sm:$0xf]
    %v1674 = vld [vmem:[%s1671 + $0x8] sm:$0xf]
    %v1675 = vld [vmem:[%s1671 + $0xc] sm:$0xf]
    %v1676 = vld [vmem:[%s1671 + $0x10] sm:$0xf]
    %v1677 = vld [vmem:[%s1671 + $0x14] sm:$0xf]
    %v1678 = vld [vmem:[%s1671 + $0x18] sm:$0xf]
    %v1679 = vld [vmem:[%s1671 + $0x1c] sm:$0xf]
    %v1680 = vld [vmem:[%s1671 + $0x20] sm:$0xf]
    %v1681 = vld [vmem:[%s1671 + $0x24] sm:$0xf]
    %v1682 = vld [vmem:[%s1671 + $0x28] sm:$0xf]
    %v1683 = vld [vmem:[%s1671 + $0x2c] sm:$0xf]
    %v1684 = vld [vmem:[%s1671 + $0x30] sm:$0xf]
    %v1685 = vld [vmem:[%s1671 + $0x34] sm:$0xf]
    %v1686 = vld [vmem:[%s1671 + $0x38] sm:$0xf]
    %v1687 = vld [vmem:[%s1671 + $0x3c] sm:$0xf]
    %v1704 = vunpack.c.l.b16 %v1672
    %v1705 = vunpack.c.l.b16 %v1673
    %v1706 = vunpack.c.l.b16 %v1674
    %v1707 = vunpack.c.l.b16 %v1675
    %v1708 = vunpack.c.l.b16 %v1676
    %v1709 = vunpack.c.l.b16 %v1677
    %v1710 = vunpack.c.l.b16 %v1678
    %v1711 = vunpack.c.l.b16 %v1679
    %v1712 = vunpack.c.l.b16 %v1680
    %v1713 = vunpack.c.l.b16 %v1681
    %v1714 = vunpack.c.l.b16 %v1682
    %v1715 = vunpack.c.l.b16 %v1683
    %v1716 = vunpack.c.l.b16 %v1684
    %v1717 = vunpack.c.l.b16 %v1685
    %v1718 = vunpack.c.l.b16 %v1686
    %v1719 = vunpack.c.l.b16 %v1687
    %v1720 = vpack.c.b16 %v1705, %v1704
    %v1721 = vpack.c.b16 %v1707, %v1706
    %v1722 = vpack.c.b16 %v1709, %v1708
    %v1723 = vpack.c.b16 %v1711, %v1710
    %v1724 = vpack.c.b16 %v1713, %v1712
    %v1725 = vpack.c.b16 %v1715, %v1714
    %v1726 = vpack.c.b16 %v1717, %v1716
    %v1727 = vpack.c.b16 %v1719, %v1718
    %1736 = vmatprep.subr.bf16.mxu0 0
    %1737 = vmatpush1.bf16.msra.mxu0 %v1720
    %1738 = vmatprep.subr.bf16.mxu0 0
    %1739 = vmatpush1.bf16.msra.mxu0 %v1721
    %1740 = vmatprep.subr.bf16.mxu0 0
    %1741 = vmatpush1.bf16.msra.mxu0 %v1722
    %1742 = vmatprep.subr.bf16.mxu0 0
    %1743 = vmatpush1.bf16.msra.mxu0 %v1723
    %1744 = vmatprep.subr.bf16.mxu0 0
    %1745 = vmatpush1.bf16.msra.mxu0 %v1724
    %1746 = vmatprep.subr.bf16.mxu0 0
    %1747 = vmatpush1.bf16.msra.mxu0 %v1725
    %1748 = vmatprep.subr.bf16.mxu0 0
    %1749 = vmatpush1.bf16.msra.mxu0 %v1726
    %1750 = vmatprep.subr.bf16.mxu0 0
    %1751 = vmatpush1.bf16.msra.mxu0 %v1727
    %1752 = vmatprep.subr.bf16.mxu0 0
    %1753 = vmatpush1.bf16.msra.mxu0 0
    %1754 = vmatprep.subr.bf16.mxu0 0
    %1755 = vmatpush1.bf16.msra.mxu0 0
    %1756 = vmatprep.subr.bf16.mxu0 0
    %1757 = vmatpush1.bf16.msra.mxu0 0
    %1758 = vmatprep.subr.bf16.mxu0 0
    %1759 = vmatpush1.bf16.msra.mxu0 0
    %1760 = vmatprep.subr.bf16.mxu0 0
    %1761 = vmatpush1.bf16.msra.mxu0 0
    %1762 = vmatprep.subr.bf16.mxu0 0
    %1763 = vmatpush1.bf16.msra.mxu0 0
    %1764 = vmatprep.subr.bf16.mxu0 0
    %1765 = vmatpush1.bf16.msra.mxu0 0
    %1766 = vmatprep.subr.bf16.mxu0 0
    %1767 = vmatpush1.bf16.msra.mxu0 0
    %1768 = vmatprep.mubr.bf16.mxu0 0
    %1769 = vmatmul.mubr.bf16.gmra.mrb[0].mxu0 %v1547
    %v1770 = vpop.f32.mrb[0].mxu0
    %v1771 = vadd.f32 0.0, %v1770
    %v1772 = vpop.f32.mrb[0].mxu0
    %v1773 = vpop.f32.mrb[0].mxu0
    %v1774 = vadd.f32 0.0, %v1773
    %v1775 = vpop.f32.mrb[0].mxu0
    %1776 = vmatprep.mubr.bf16.mxu0 0
    %1777 = vmatmul.mubr.bf16.gmra.mrb[0].mxu0 %v1548
    %v1778 = vpop.f32.mrb[0].mxu0
    %v1779 = vadd.f32 0.0, %v1778
    %v1780 = vpop.f32.mrb[0].mxu0
    %v1781 = vpop.f32.mrb[0].mxu0
    %v1782 = vadd.f32 0.0, %v1781
    %v1783 = vpop.f32.mrb[0].mxu0
    %1784 = vdwg.mxu0
    %v1785 = vrot.slane %v1771, 4
    %v1786 = vrot.slane %v1779, 4
    %v1787 = vrot.slane %v1774, 4
    %v1788 = vrot.slane %v1782, 4
    %v1789 = vsel %vm1524, %v1785, %v1787
    %v1790 = vsel %vm1524, %v1786, %v1788
    %v1791 = vsel %vm1524, %v1787, %v1785
    %v1792 = vsel %vm1524, %v1788, %v1786
    %v1793 = vsel %vm1533, %v1791, 0.0
    %v1794 = vsel %vm1534, %v1789, 0.0
    %v1795 = vsel %vm1533, %v1792, 0.0
    %v1796 = vsel %vm1534, %v1790, 0.0
    %v1797 = vadd.f32 %v1657, %v1793
    %v1798 = vadd.f32 %v1660, %v1794
    %v1799 = vadd.f32 %v1665, %v1795
    %v1800 = vadd.f32 %v1668, %v1796
    %v1801 = vmax.f32 %v1797, 0.0
    %v1802 = vmax.f32 %v1798, 0.0
    %v1803 = vmax.f32 %v1799, 0.0
    %v1804 = vmax.f32 %v1800, 0.0
    %v1805 = vunpack.c.l.bf16 %v1282
    %v1806 = vunpack.c.h.bf16 %v1282
    %v1807 = vunpack.c.l.bf16 %v1283
    %v1808 = vunpack.c.h.bf16 %v1283
    %v1809 = vadd.f32 %v1801, %v1805
    %v1810 = vadd.f32 %v1802, %v1806
    %v1811 = vadd.f32 %v1803, %v1807
    %v1812 = vadd.f32 %v1804, %v1808
    %v1813 = vmax.f32 %v1809, 0.0
    %v1814 = vmax.f32 %v1810, 0.0
    %v1815 = vmax.f32 %v1811, 0.0
    %v1816 = vmax.f32 %v1812, 0.0
    %1817 = vst [vmem:[#allocation10] sm:$0xff] %v1813
    %1818 = vst [vmem:[#allocation10 + $0x8] sm:$0xff] %v1814
    %1819 = vst [vmem:[#allocation10 + $0x10] sm:$0xff] %v1815
    %1820 = vst [vmem:[#allocation10 + $0x18] sm:$0xff] %v1816
    // Predicated region
    $region46: #{tpu_custom_call.1} parent=1 // pred_check
      _
    $region47: #{tpu_custom_call.1} parent=1 // pred_check_branch
      %1822 = sbr.rel (0) target = $region49
    $region48: #{tpu_custom_call.1} parent=1 // pred_region
      %s1824 = ssub.s32 512, 512
      %1825 = vsyncadd [#allocation4], %s1824
      %s1826 = sshll.u32 [#allocation10], 4
      %s1827 = int_to_ptr.vmem [resolvable:$true] %s1826
      %1832 = dma.vmem_to_hbm [thread:$0]  %s1827, 512, %s7, [#allocation4], 128, 128, 8
    $region49: #{tpu_custom_call.1} parent=1 // pred_fallthru
      _
    // Predicated region
    $region50: #{tpu_custom_call.1} parent=1 // pred_check
      _
    $region51: #{tpu_custom_call.1} parent=1 // pred_check_branch
      %1834 = sbr.rel (0) target = $region53
    $region52: #{tpu_custom_call.1} parent=1 // pred_region
      %1835 = dma.done [#allocation4], 512
    $region53: #{tpu_custom_call.1} parent=1 // pred_fallthru
      _
    %1836 = vsyncpa [#allocation3], 1
    %1837 = vsyncpa [#allocation6], 1
    %1838 = vsyncpa [#allocation9], 1
    %1839 = vsyncpa [#allocation4], 1

</llo_original>
